<compile_context>
chip_gen: v7x
topology: tpu7x:2x2x1
jax: 0.10.0
libtpu: 0.0.40
codegen_flags: <defaults>
</compile_context>

<pallas_src>
import functools

import jax
import jax.numpy as jnp
from jax import lax
from jax.experimental import pallas as pl
from jax.experimental.pallas import tpu as pltpu

KS = 7
PAD = KS // 2
_LANES = 128
_SUBLANES = 8
_LANE_CHUNK = 512               # lane-chunk width of the streaming reduction
_VMEM_BLOCK_BUDGET = 8 << 20    # per-input-block byte budget (v7x-safe)


def _round_up(n, m):
    return (n + m - 1) // m * m


def _pick_channel_tile(C, HW, itemsize, budget_bytes=_VMEM_BLOCK_BUDGET):
    """Largest multiple-of-8 channel tile keeping one x block <= budget.

    Any C is supported: if no near-budget tile divides C evenly, the ragged
    last grid tile is masked in-kernel.
    """
    if C * HW * itemsize <= budget_bytes or C <= _SUBLANES:
        return C
    ct = (budget_bytes // (HW * itemsize)) // _SUBLANES * _SUBLANES
    ct = max(_SUBLANES, min(ct, C))
    # Prefer an even split (no ragged last tile) if it stays near budget.
    for cand in range(ct, max(ct // 2, _SUBLANES) - 1, -_SUBLANES):
        if C % cand == 0:
            return cand
    return ct


def _reduce_lane_chunk(x_ref, sum_ref, max_ref, *, lo, lc, CT, SR, c_base, C,
                       needs_mask):
    """Fold one x block's channels into sum/max scratch for lanes [lo, lo+lc).

    Loop carry is a (SR, lc) vreg tile pair, written back to scratch once per
    (grid step, lane chunk).
    """
    cols = slice(lo, lo + lc)
    n_full = CT // SR
    rem = CT - n_full * SR

    def load(cstart, rows):
        return x_ref[pl.ds(cstart, rows), cols].astype(jnp.float32)

    def step(cstart, s, m):
        blk = load(cstart, SR)
        if needs_mask:
            ch = lax.broadcasted_iota(jnp.int32, (SR, lc), 0) + (c_base + cstart)
            keep = ch < C
            s = s + jnp.where(keep, blk, 0.0)
            m = jnp.maximum(m, jnp.where(keep, blk, -jnp.inf))
        else:
            s = s + blk
            m = jnp.maximum(m, blk)
        return s, m

    s, m = sum_ref[:, cols], max_ref[:, cols]
    if n_full > 0:
        if n_full <= 8:          # short loops: unroll for scheduler visibility
            for ci in range(n_full):
                s, m = step(ci * SR, s, m)
        else:
            def body(ci, carry):
                cstart = pl.multiple_of(ci * SR, SR)
                return step(cstart, *carry)
            s, m = lax.fori_loop(0, n_full, body, (s, m))
    if rem > 0:                  # only when CT == C and C % 8 != 0
        blk = load(n_full * SR, rem)
        s = s + jnp.concatenate(
            [blk, jnp.zeros((SR - rem, lc), jnp.float32)], axis=0)
        m = jnp.maximum(m, jnp.concatenate(
            [blk, jnp.full((SR - rem, lc), -jnp.inf, jnp.float32)], axis=0))
    sum_ref[:, cols] = s
    max_ref[:, cols] = m


def _spatial_attention_kernel(w_ref, x_ref, o_ref, sum_ref, max_ref, pad_ref,
                              *, C, CT, SR, H, W, Hp, Wp, needs_mask):
    # w_ref   : SMEM f32[2*KS*KS]   flattened conv weight (OIHW, O=1)
    # x_ref   : VMEM [CT, H*W]      one (batch, channel-tile) lane-dense block
    # o_ref   : VMEM [H, W]         attention map for this batch element
    # sum_ref : VMEM f32[SR, H*W]   per-sublane running channel sums
    # max_ref : VMEM f32[SR, H*W]   per-sublane running channel maxima
    # pad_ref : VMEM f32[2, Hp, Wp] zero-padded [avg, max] maps for the conv
    k = pl.program_id(1)
    HW = H * W

    @pl.when(k == 0)
    def _init():
        sum_ref[...] = jnp.zeros_like(sum_ref)
        max_ref[...] = jnp.full_like(max_ref, -jnp.inf)

    # ---- streaming channel reduction, lane-chunked (vld + VPU add/max) -----
    c_base = k * CT
    lo = 0
    while lo < HW:
        lc = min(_LANE_CHUNK, HW - lo)
        _reduce_lane_chunk(x_ref, sum_ref, max_ref, lo=lo, lc=lc, CT=CT, SR=SR,
                           c_base=c_base, C=C, needs_mask=needs_mask)
        lo += lc

    # ---- last channel tile: sublane reduce, pad, 7x7 conv, sigmoid ---------
    @pl.when(k == pl.num_programs(1) - 1)
    def _finalize():
        inv_c = jnp.float32(1.0 / C)                       # folded at trace
        avg_flat = jnp.sum(sum_ref[...], axis=0, keepdims=True) * inv_c
        max_flat = jnp.max(max_ref[...], axis=0, keepdims=True)

        # Lane-aligned row unpack: rows start at lane 0; the 3-lane left pad
        # is folded into the roll shifts below; lanes [W, Wp) stay zero and
        # provide the right pad (and the wrapped-around left pad).
        pad_ref[...] = jnp.zeros_like(pad_ref)
        for h in range(H):
            lo_ = h * W
            pad_ref[0, PAD + h:PAD + h + 1, 0:W] = avg_flat[:, lo_:lo_ + W]
            pad_ref[1, PAD + h:PAD + h + 1, 0:W] = max_flat[:, lo_:lo_ + W]

        # 7x7 conv: per channel, 7 lane rolls (XLU); per kh a pure-VPU partial
        # sum over kw and ONE sublane slice -> 14 rolls + 14 slices total.
        acc0 = jnp.zeros((H, W), jnp.float32)
        acc1 = jnp.zeros((H, W), jnp.float32)
        for c in range(2):
            f = pad_ref[c]                                       # (Hp, Wp)
            rolled = []
            for kw in range(KS):
                shift = (Wp - kw + PAD) % Wp
                rolled.append(pltpu.roll(f, shift=shift, axis=1) if shift else f)
            for kh in range(KS):
                base = c * KS * KS + kh * KS
                r = rolled[0] * w_ref[base]
                for kw in range(1, KS):
                    r = r + rolled[kw] * w_ref[base + kw]
                part = r[kh:kh + H, 0:W]
                if (c * KS + kh) % 2 == 0:
                    acc0 = acc0 + part
                else:
                    acc1 = acc1 + part
        o_ref[...] = jax.nn.sigmoid(acc0 + acc1).astype(o_ref.dtype)


@jax.jit
def spatial_attention(x, weight):
    """x: [B, C, H, W]; weight: [1, 2, KS, KS] -> sigmoid(conv) [B, 1, H, W]."""
    B, C, H, W = x.shape
    HW = H * W
    itemsize = jnp.dtype(x.dtype).itemsize
    CT = _pick_channel_tile(C, HW, itemsize)
    KT = pl.cdiv(C, CT)
    SR = min(_SUBLANES, CT)
    needs_mask = (C % CT) != 0
    Hp = _round_up(H + 2 * PAD, _SUBLANES)
    Wp = _round_up(W + 2 * PAD, _LANES)

    x_flat = x.reshape(B, C, HW)                     # lane-dense view of x
    w_flat = weight.reshape(-1).astype(jnp.float32)

    kernel = functools.partial(
        _spatial_attention_kernel, C=C, CT=CT, SR=SR, H=H, W=W, Hp=Hp, Wp=Wp,
        needs_mask=needs_mask)

    # VMEM budget: double-buffered x block + scratch + out; v7x (64 MiB) safe.
    lane_pad = _round_up(HW, _LANES)
    scratch_bytes = 2 * _SUBLANES * lane_pad * 4 + 2 * Hp * Wp * 4
    out_bytes = 2 * H * _round_up(W, _LANES) * itemsize
    vmem_limit = max(32 << 20,
                     2 * CT * HW * itemsize + scratch_bytes + out_bytes
                     + (4 << 20))
    vmem_limit = int(min(vmem_limit, 96 << 20))

    out = pl.pallas_call(
        kernel,
        out_shape=jax.ShapeDtypeStruct((B, H, W), x.dtype),
        grid=(B, KT),
        in_specs=[
            pl.BlockSpec(memory_space=pltpu.MemorySpace.SMEM),      # weights
            pl.BlockSpec((None, CT, HW), lambda b, k: (b, k, 0)),   # x tile
        ],
        out_specs=pl.BlockSpec((None, H, W), lambda b, k: (b, 0, 0)),
        scratch_shapes=[
            pltpu.VMEM((SR, HW), jnp.float32),       # running channel sums
            pltpu.VMEM((SR, HW), jnp.float32),       # running channel maxima
            pltpu.VMEM((2, Hp, Wp), jnp.float32),    # padded [avg, max] maps
        ],
        compiler_params=pltpu.CompilerParams(
            dimension_semantics=("parallel", "arbitrary"),
            vmem_limit_bytes=vmem_limit),
        cost_estimate=pl.CostEstimate(
            flops=B * HW * (2 * C + 4 * KS * KS),
            transcendentals=B * HW,
            bytes_accessed=(B * C * HW + B * HW) * itemsize + 2 * KS * KS * 4),
    )(w_flat, x_flat)

    return out.reshape(B, 1, H, W)


def reference(x, weight):
    avg = jnp.mean(x, axis=1, keepdims=True)
    mx = jnp.max(x, axis=1, keepdims=True)
    cat = jnp.concatenate([avg, mx], axis=1)
    y = lax.conv_general_dilated(
        cat, weight, window_strides=(1, 1),
        padding=[(PAD, PAD), (PAD, PAD)],
        dimension_numbers=("NCHW", "OIHW", "NCHW"))
    return jax.nn.sigmoid(y)


if __name__ == "__main__":
    key = jax.random.PRNGKey(0)
    kx, kw = jax.random.split(key)

    B, C, H, W = 2, 4, 16, 16
    x = jax.random.normal(kx, (B, C, H, W), dtype=jnp.float32)

    # deterministic Conv2d(2, 1, 7, bias=False)-shaped weight init
    fan_in = 2 * KS * KS
    bound = 1.0 / (fan_in ** 0.5)
    weight = jax.random.uniform(kw, (1, 2, KS, KS), dtype=jnp.float32,
                                minval=-bound, maxval=bound)

    out = jax.block_until_ready(spatial_attention(x, weight))
    ref = jax.block_until_ready(reference(x, weight))

    assert out.shape == (B, 1, H, W)
    err = float(jnp.max(jnp.abs(out - ref)))
    assert jnp.allclose(out, ref, atol=1e-5, rtol=1e-5), err
    print("KERNEL_OK")
</pallas_src>

<mosaic_0001>
module attributes {stable_mosaic.version = 11 : i64} {
  func.func @_spatial_attention_kernel(%arg0: i32, %arg1: i32, %arg2: memref<98xf32, #tpu.memory_space<smem>>, %arg3: memref<1x4x256xf32, #tpu.memory_space<vmem>>, %arg4: memref<1x16x16xf32, #tpu.memory_space<vmem>>, %arg5: memref<4x256xf32, #tpu.memory_space<vmem>>, %arg6: memref<4x256xf32, #tpu.memory_space<vmem>>, %arg7: memref<2x24x128xf32, #tpu.memory_space<vmem>>) attributes {dimension_semantics = [#tpu.dimension_semantics<parallel>, #tpu.dimension_semantics<arbitrary>], iteration_bounds = array<i64: 2, 1>, scalar_prefetch = 0 : i64, scratch_operands = 3 : i64, tpu.core_type = #tpu.core_type<tc>, window_params = [{transform_indices = @transform_0, window_bounds = array<i64: 98>}, {transform_indices = @transform_1, window_bounds = array<i64: 1, 4, 256>}, {transform_indices = @transform_2, window_bounds = array<i64: 1, 16, 16>}]} {
    %c0_i32 = arith.constant 0 : i32
    %0 = arith.cmpi eq, %arg1, %c0_i32 : i32
    %1 = arith.extui %0 : i1 to i32
    %c0_i32_0 = arith.constant 0 : i32
    %2 = arith.cmpi ne, %1, %c0_i32_0 : i32
    scf.if %2 {
      %cst = arith.constant 0.000000e+00 : f32
      %14 = vector.broadcast %cst : f32 to vector<4x256xf32>
      %c0_13 = arith.constant 0 : index
      %c0_14 = arith.constant 0 : index
      %15 = vector.load %arg5[%c0_13, %c0_14] : memref<4x256xf32, #tpu.memory_space<vmem>>, vector<4x256xf32>
      tpu.vector_store %arg5[%c0_13, %c0_14], %14 {strides = array<i32>} : memref<4x256xf32, #tpu.memory_space<vmem>>, vector<4x256xf32>,
      %cst_15 = arith.constant 0xFF800000 : f32
      %16 = vector.broadcast %cst_15 : f32 to vector<4x256xf32>
      %c0_16 = arith.constant 0 : index
      %c0_17 = arith.constant 0 : index
      %17 = vector.load %arg6[%c0_16, %c0_17] : memref<4x256xf32, #tpu.memory_space<vmem>>, vector<4x256xf32>
      tpu.vector_store %arg6[%c0_16, %c0_17], %16 {strides = array<i32>} : memref<4x256xf32, #tpu.memory_space<vmem>>, vector<4x256xf32>,
    } else {
    }
    %c0 = arith.constant 0 : index
    %c0_1 = arith.constant 0 : index
    %3 = vector.load %arg5[%c0, %c0_1] : memref<4x256xf32, #tpu.memory_space<vmem>>, vector<4x256xf32>
    %c0_2 = arith.constant 0 : index
    %c0_3 = arith.constant 0 : index
    %4 = vector.load %arg6[%c0_2, %c0_3] : memref<4x256xf32, #tpu.memory_space<vmem>>, vector<4x256xf32>
    %c0_4 = arith.constant 0 : index
    %c0_5 = arith.constant 0 : index
    %c0_6 = arith.constant 0 : index
    %5 = vector.load %arg3[%c0_4, %c0_5, %c0_6] : memref<1x4x256xf32, #tpu.memory_space<vmem>>, vector<1x4x256xf32>
    %6 = vector.shape_cast %5 : vector<1x4x256xf32> to vector<4x256xf32>
    %7 = arith.addf %3, %6 : vector<4x256xf32>
    %8 = arith.maximumf %4, %6 : vector<4x256xf32>
    %c0_7 = arith.constant 0 : index
    %c0_8 = arith.constant 0 : index
    %9 = vector.load %arg5[%c0_7, %c0_8] : memref<4x256xf32, #tpu.memory_space<vmem>>, vector<4x256xf32>
    tpu.vector_store %arg5[%c0_7, %c0_8], %7 {strides = array<i32>} : memref<4x256xf32, #tpu.memory_space<vmem>>, vector<4x256xf32>,
    %c0_9 = arith.constant 0 : index
    %c0_10 = arith.constant 0 : index
    %10 = vector.load %arg6[%c0_9, %c0_10] : memref<4x256xf32, #tpu.memory_space<vmem>>, vector<4x256xf32>
    tpu.vector_store %arg6[%c0_9, %c0_10], %8 {strides = array<i32>} : memref<4x256xf32, #tpu.memory_space<vmem>>, vector<4x256xf32>,
    %c0_i32_11 = arith.constant 0 : i32
    %11 = arith.cmpi eq, %arg1, %c0_i32_11 : i32
    %12 = arith.extui %11 : i1 to i32
    %c0_i32_12 = arith.constant 0 : i32
    %13 = arith.cmpi ne, %12, %c0_i32_12 : i32
    scf.if %13 {
      %c0_13 = arith.constant 0 : index
      %c0_14 = arith.constant 0 : index
      %14 = vector.load %arg5[%c0_13, %c0_14] : memref<4x256xf32, #tpu.memory_space<vmem>>, vector<4x256xf32>
      %cst = arith.constant dense<0.000000e+00> : vector<256xf32>
      %15 = vector.multi_reduction <add>, %14, %cst [0] : vector<4x256xf32> to vector<256xf32>
      %16 = vector.shape_cast %15 : vector<256xf32> to vector<1x256xf32>
      %cst_15 = arith.constant 2.500000e-01 : f32
      %17 = vector.broadcast %cst_15 : f32 to vector<1x256xf32>
      %18 = arith.mulf %16, %17 : vector<1x256xf32>
      %c0_16 = arith.constant 0 : index
      %c0_17 = arith.constant 0 : index
      %19 = vector.load %arg6[%c0_16, %c0_17] : memref<4x256xf32, #tpu.memory_space<vmem>>, vector<4x256xf32>
      %cst_18 = arith.constant dense<0xFF800000> : vector<256xf32>
      %20 = vector.multi_reduction <maximumf>, %19, %cst_18 [0] : vector<4x256xf32> to vector<256xf32>
      %21 = vector.shape_cast %20 : vector<256xf32> to vector<1x256xf32>
      %cst_19 = arith.constant 0.000000e+00 : f32
      %22 = vector.broadcast %cst_19 : f32 to vector<2x24x128xf32>
      %c0_20 = arith.constant 0 : index
      %c0_21 = arith.constant 0 : index
      %c0_22 = arith.constant 0 : index
      %23 = vector.load %arg7[%c0_20, %c0_21, %c0_22] : memref<2x24x128xf32, #tpu.memory_space<vmem>>, vector<2x24x128xf32>
      tpu.vector_store %arg7[%c0_20, %c0_21, %c0_22], %22 {strides = array<i32>} : memref<2x24x128xf32, #tpu.memory_space<vmem>>, vector<2x24x128xf32>,
      %24 = vector.extract_strided_slice %18 {offsets = [0, 0], sizes = [1, 16], strides = [1, 1]} : vector<1x256xf32> to vector<1x16xf32>
      %c0_23 = arith.constant 0 : index
      %c3 = arith.constant 3 : index
      %c0_24 = arith.constant 0 : index
      %25 = vector.load %arg7[%c0_23, %c3, %c0_24] : memref<2x24x128xf32, #tpu.memory_space<vmem>>, vector<1x1x16xf32>
      %26 = vector.shape_cast %25 : vector<1x1x16xf32> to vector<1x16xf32>
      %27 = vector.shape_cast %24 : vector<1x16xf32> to vector<1x1x16xf32>
      tpu.vector_store %arg7[%c0_23, %c3, %c0_24], %27 {strides = array<i32>} : memref<2x24x128xf32, #tpu.memory_space<vmem>>, vector<1x1x16xf32>,
      %28 = vector.extract_strided_slice %21 {offsets = [0, 0], sizes = [1, 16], strides = [1, 1]} : vector<1x256xf32> to vector<1x16xf32>
      %c1 = arith.constant 1 : index
      %c3_25 = arith.constant 3 : index
      %c0_26 = arith.constant 0 : index
      %29 = vector.load %arg7[%c1, %c3_25, %c0_26] : memref<2x24x128xf32, #tpu.memory_space<vmem>>, vector<1x1x16xf32>
      %30 = vector.shape_cast %29 : vector<1x1x16xf32> to vector<1x16xf32>
      %31 = vector.shape_cast %28 : vector<1x16xf32> to vector<1x1x16xf32>
      tpu.vector_store %arg7[%c1, %c3_25, %c0_26], %31 {strides = array<i32>} : memref<2x24x128xf32, #tpu.memory_space<vmem>>, vector<1x1x16xf32>,
      %32 = vector.extract_strided_slice %18 {offsets = [0, 16], sizes = [1, 16], strides = [1, 1]} : vector<1x256xf32> to vector<1x16xf32>
      %c0_27 = arith.constant 0 : index
      %c4 = arith.constant 4 : index
      %c0_28 = arith.constant 0 : index
      %33 = vector.load %arg7[%c0_27, %c4, %c0_28] : memref<2x24x128xf32, #tpu.memory_space<vmem>>, vector<1x1x16xf32>
      %34 = vector.shape_cast %33 : vector<1x1x16xf32> to vector<1x16xf32>
      %35 = vector.shape_cast %32 : vector<1x16xf32> to vector<1x1x16xf32>
      tpu.vector_store %arg7[%c0_27, %c4, %c0_28], %35 {strides = array<i32>} : memref<2x24x128xf32, #tpu.memory_space<vmem>>, vector<1x1x16xf32>,
      %36 = vector.extract_strided_slice %21 {offsets = [0, 16], sizes = [1, 16], strides = [1, 1]} : vector<1x256xf32> to vector<1x16xf32>
      %c1_29 = arith.constant 1 : index
      %c4_30 = arith.constant 4 : index
      %c0_31 = arith.constant 0 : index
      %37 = vector.load %arg7[%c1_29, %c4_30, %c0_31] : memref<2x24x128xf32, #tpu.memory_space<vmem>>, vector<1x1x16xf32>
      %38 = vector.shape_cast %37 : vector<1x1x16xf32> to vector<1x16xf32>
      %39 = vector.shape_cast %36 : vector<1x16xf32> to vector<1x1x16xf32>
      tpu.vector_store %arg7[%c1_29, %c4_30, %c0_31], %39 {strides = array<i32>} : memref<2x24x128xf32, #tpu.memory_space<vmem>>, vector<1x1x16xf32>,
      %40 = vector.extract_strided_slice %18 {offsets = [0, 32], sizes = [1, 16], strides = [1, 1]} : vector<1x256xf32> to vector<1x16xf32>
      %c0_32 = arith.constant 0 : index
      %c5 = arith.constant 5 : index
      %c0_33 = arith.constant 0 : index
      %41 = vector.load %arg7[%c0_32, %c5, %c0_33] : memref<2x24x128xf32, #tpu.memory_space<vmem>>, vector<1x1x16xf32>
      %42 = vector.shape_cast %41 : vector<1x1x16xf32> to vector<1x16xf32>
      %43 = vector.shape_cast %40 : vector<1x16xf32> to vector<1x1x16xf32>
      tpu.vector_store %arg7[%c0_32, %c5, %c0_33], %43 {strides = array<i32>} : memref<2x24x128xf32, #tpu.memory_space<vmem>>, vector<1x1x16xf32>,
      %44 = vector.extract_strided_slice %21 {offsets = [0, 32], sizes = [1, 16], strides = [1, 1]} : vector<1x256xf32> to vector<1x16xf32>
      %c1_34 = arith.constant 1 : index
      %c5_35 = arith.constant 5 : index
      %c0_36 = arith.constant 0 : index
      %45 = vector.load %arg7[%c1_34, %c5_35, %c0_36] : memref<2x24x128xf32, #tpu.memory_space<vmem>>, vector<1x1x16xf32>
      %46 = vector.shape_cast %45 : vector<1x1x16xf32> to vector<1x16xf32>
      %47 = vector.shape_cast %44 : vector<1x16xf32> to vector<1x1x16xf32>
      tpu.vector_store %arg7[%c1_34, %c5_35, %c0_36], %47 {strides = array<i32>} : memref<2x24x128xf32, #tpu.memory_space<vmem>>, vector<1x1x16xf32>,
      %48 = vector.extract_strided_slice %18 {offsets = [0, 48], sizes = [1, 16], strides = [1, 1]} : vector<1x256xf32> to vector<1x16xf32>
      %c0_37 = arith.constant 0 : index
      %c6 = arith.constant 6 : index
      %c0_38 = arith.constant 0 : index
      %49 = vector.load %arg7[%c0_37, %c6, %c0_38] : memref<2x24x128xf32, #tpu.memory_space<vmem>>, vector<1x1x16xf32>
      %50 = vector.shape_cast %49 : vector<1x1x16xf32> to vector<1x16xf32>
      %51 = vector.shape_cast %48 : vector<1x16xf32> to vector<1x1x16xf32>
      tpu.vector_store %arg7[%c0_37, %c6, %c0_38], %51 {strides = array<i32>} : memref<2x24x128xf32, #tpu.memory_space<vmem>>, vector<1x1x16xf32>,
      %52 = vector.extract_strided_slice %21 {offsets = [0, 48], sizes = [1, 16], strides = [1, 1]} : vector<1x256xf32> to vector<1x16xf32>
      %c1_39 = arith.constant 1 : index
      %c6_40 = arith.constant 6 : index
      %c0_41 = arith.constant 0 : index
      %53 = vector.load %arg7[%c1_39, %c6_40, %c0_41] : memref<2x24x128xf32, #tpu.memory_space<vmem>>, vector<1x1x16xf32>
      %54 = vector.shape_cast %53 : vector<1x1x16xf32> to vector<1x16xf32>
      %55 = vector.shape_cast %52 : vector<1x16xf32> to vector<1x1x16xf32>
      tpu.vector_store %arg7[%c1_39, %c6_40, %c0_41], %55 {strides = array<i32>} : memref<2x24x128xf32, #tpu.memory_space<vmem>>, vector<1x1x16xf32>,
      %56 = vector.extract_strided_slice %18 {offsets = [0, 64], sizes = [1, 16], strides = [1, 1]} : vector<1x256xf32> to vector<1x16xf32>
      %c0_42 = arith.constant 0 : index
      %c7 = arith.constant 7 : index
      %c0_43 = arith.constant 0 : index
      %57 = vector.load %arg7[%c0_42, %c7, %c0_43] : memref<2x24x128xf32, #tpu.memory_space<vmem>>, vector<1x1x16xf32>
      %58 = vector.shape_cast %57 : vector<1x1x16xf32> to vector<1x16xf32>
      %59 = vector.shape_cast %56 : vector<1x16xf32> to vector<1x1x16xf32>
      tpu.vector_store %arg7[%c0_42, %c7, %c0_43], %59 {strides = array<i32>} : memref<2x24x128xf32, #tpu.memory_space<vmem>>, vector<1x1x16xf32>,
      %60 = vector.extract_strided_slice %21 {offsets = [0, 64], sizes = [1, 16], strides = [1, 1]} : vector<1x256xf32> to vector<1x16xf32>
      %c1_44 = arith.constant 1 : index
      %c7_45 = arith.constant 7 : index
      %c0_46 = arith.constant 0 : index
      %61 = vector.load %arg7[%c1_44, %c7_45, %c0_46] : memref<2x24x128xf32, #tpu.memory_space<vmem>>, vector<1x1x16xf32>
      %62 = vector.shape_cast %61 : vector<1x1x16xf32> to vector<1x16xf32>
      %63 = vector.shape_cast %60 : vector<1x16xf32> to vector<1x1x16xf32>
      tpu.vector_store %arg7[%c1_44, %c7_45, %c0_46], %63 {strides = array<i32>} : memref<2x24x128xf32, #tpu.memory_space<vmem>>, vector<1x1x16xf32>,
      %64 = vector.extract_strided_slice %18 {offsets = [0, 80], sizes = [1, 16], strides = [1, 1]} : vector<1x256xf32> to vector<1x16xf32>
      %c0_47 = arith.constant 0 : index
      %c8 = arith.constant 8 : index
      %c0_48 = arith.constant 0 : index
      %65 = vector.load %arg7[%c0_47, %c8, %c0_48] : memref<2x24x128xf32, #tpu.memory_space<vmem>>, vector<1x1x16xf32>
      %66 = vector.shape_cast %65 : vector<1x1x16xf32> to vector<1x16xf32>
      %67 = vector.shape_cast %64 : vector<1x16xf32> to vector<1x1x16xf32>
      tpu.vector_store %arg7[%c0_47, %c8, %c0_48], %67 {strides = array<i32>} : memref<2x24x128xf32, #tpu.memory_space<vmem>>, vector<1x1x16xf32>,
      %68 = vector.extract_strided_slice %21 {offsets = [0, 80], sizes = [1, 16], strides = [1, 1]} : vector<1x256xf32> to vector<1x16xf32>
      %c1_49 = arith.constant 1 : index
      %c8_50 = arith.constant 8 : index
      %c0_51 = arith.constant 0 : index
      %69 = vector.load %arg7[%c1_49, %c8_50, %c0_51] : memref<2x24x128xf32, #tpu.memory_space<vmem>>, vector<1x1x16xf32>
      %70 = vector.shape_cast %69 : vector<1x1x16xf32> to vector<1x16xf32>
      %71 = vector.shape_cast %68 : vector<1x16xf32> to vector<1x1x16xf32>
      tpu.vector_store %arg7[%c1_49, %c8_50, %c0_51], %71 {strides = array<i32>} : memref<2x24x128xf32, #tpu.memory_space<vmem>>, vector<1x1x16xf32>,
      %72 = vector.extract_strided_slice %18 {offsets = [0, 96], sizes = [1, 16], strides = [1, 1]} : vector<1x256xf32> to vector<1x16xf32>
      %c0_52 = arith.constant 0 : index
      %c9 = arith.constant 9 : index
      %c0_53 = arith.constant 0 : index
      %73 = vector.load %arg7[%c0_52, %c9, %c0_53] : memref<2x24x128xf32, #tpu.memory_space<vmem>>, vector<1x1x16xf32>
      %74 = vector.shape_cast %73 : vector<1x1x16xf32> to vector<1x16xf32>
      %75 = vector.shape_cast %72 : vector<1x16xf32> to vector<1x1x16xf32>
      tpu.vector_store %arg7[%c0_52, %c9, %c0_53], %75 {strides = array<i32>} : memref<2x24x128xf32, #tpu.memory_space<vmem>>, vector<1x1x16xf32>,
      %76 = vector.extract_strided_slice %21 {offsets = [0, 96], sizes = [1, 16], strides = [1, 1]} : vector<1x256xf32> to vector<1x16xf32>
      %c1_54 = arith.constant 1 : index
      %c9_55 = arith.constant 9 : index
      %c0_56 = arith.constant 0 : index
      %77 = vector.load %arg7[%c1_54, %c9_55, %c0_56] : memref<2x24x128xf32, #tpu.memory_space<vmem>>, vector<1x1x16xf32>
      %78 = vector.shape_cast %77 : vector<1x1x16xf32> to vector<1x16xf32>
      %79 = vector.shape_cast %76 : vector<1x16xf32> to vector<1x1x16xf32>
      tpu.vector_store %arg7[%c1_54, %c9_55, %c0_56], %79 {strides = array<i32>} : memref<2x24x128xf32, #tpu.memory_space<vmem>>, vector<1x1x16xf32>,
      %80 = vector.extract_strided_slice %18 {offsets = [0, 112], sizes = [1, 16], strides = [1, 1]} : vector<1x256xf32> to vector<1x16xf32>
      %c0_57 = arith.constant 0 : index
      %c10 = arith.constant 10 : index
      %c0_58 = arith.constant 0 : index
      %81 = vector.load %arg7[%c0_57, %c10, %c0_58] : memref<2x24x128xf32, #tpu.memory_space<vmem>>, vector<1x1x16xf32>
      %82 = vector.shape_cast %81 : vector<1x1x16xf32> to vector<1x16xf32>
      %83 = vector.shape_cast %80 : vector<1x16xf32> to vector<1x1x16xf32>
      tpu.vector_store %arg7[%c0_57, %c10, %c0_58], %83 {strides = array<i32>} : memref<2x24x128xf32, #tpu.memory_space<vmem>>, vector<1x1x16xf32>,
      %84 = vector.extract_strided_slice %21 {offsets = [0, 112], sizes = [1, 16], strides = [1, 1]} : vector<1x256xf32> to vector<1x16xf32>
      %c1_59 = arith.constant 1 : index
      %c10_60 = arith.constant 10 : index
      %c0_61 = arith.constant 0 : index
      %85 = vector.load %arg7[%c1_59, %c10_60, %c0_61] : memref<2x24x128xf32, #tpu.memory_space<vmem>>, vector<1x1x16xf32>
      %86 = vector.shape_cast %85 : vector<1x1x16xf32> to vector<1x16xf32>
      %87 = vector.shape_cast %84 : vector<1x16xf32> to vector<1x1x16xf32>
      tpu.vector_store %arg7[%c1_59, %c10_60, %c0_61], %87 {strides = array<i32>} : memref<2x24x128xf32, #tpu.memory_space<vmem>>, vector<1x1x16xf32>,
      %88 = vector.extract_strided_slice %18 {offsets = [0, 128], sizes = [1, 16], strides = [1, 1]} : vector<1x256xf32> to vector<1x16xf32>
      %c0_62 = arith.constant 0 : index
      %c11 = arith.constant 11 : index
      %c0_63 = arith.constant 0 : index
      %89 = vector.load %arg7[%c0_62, %c11, %c0_63] : memref<2x24x128xf32, #tpu.memory_space<vmem>>, vector<1x1x16xf32>
      %90 = vector.shape_cast %89 : vector<1x1x16xf32> to vector<1x16xf32>
      %91 = vector.shape_cast %88 : vector<1x16xf32> to vector<1x1x16xf32>
      tpu.vector_store %arg7[%c0_62, %c11, %c0_63], %91 {strides = array<i32>} : memref<2x24x128xf32, #tpu.memory_space<vmem>>, vector<1x1x16xf32>,
      %92 = vector.extract_strided_slice %21 {offsets = [0, 128], sizes = [1, 16], strides = [1, 1]} : vector<1x256xf32> to vector<1x16xf32>
      %c1_64 = arith.constant 1 : index
      %c11_65 = arith.constant 11 : index
      %c0_66 = arith.constant 0 : index
      %93 = vector.load %arg7[%c1_64, %c11_65, %c0_66] : memref<2x24x128xf32, #tpu.memory_space<vmem>>, vector<1x1x16xf32>
      %94 = vector.shape_cast %93 : vector<1x1x16xf32> to vector<1x16xf32>
      %95 = vector.shape_cast %92 : vector<1x16xf32> to vector<1x1x16xf32>
      tpu.vector_store %arg7[%c1_64, %c11_65, %c0_66], %95 {strides = array<i32>} : memref<2x24x128xf32, #tpu.memory_space<vmem>>, vector<1x1x16xf32>,
      %96 = vector.extract_strided_slice %18 {offsets = [0, 144], sizes = [1, 16], strides = [1, 1]} : vector<1x256xf32> to vector<1x16xf32>
      %c0_67 = arith.constant 0 : index
      %c12 = arith.constant 12 : index
      %c0_68 = arith.constant 0 : index
      %97 = vector.load %arg7[%c0_67, %c12, %c0_68] : memref<2x24x128xf32, #tpu.memory_space<vmem>>, vector<1x1x16xf32>
      %98 = vector.shape_cast %97 : vector<1x1x16xf32> to vector<1x16xf32>
      %99 = vector.shape_cast %96 : vector<1x16xf32> to vector<1x1x16xf32>
      tpu.vector_store %arg7[%c0_67, %c12, %c0_68], %99 {strides = array<i32>} : memref<2x24x128xf32, #tpu.memory_space<vmem>>, vector<1x1x16xf32>,
      %100 = vector.extract_strided_slice %21 {offsets = [0, 144], sizes = [1, 16], strides = [1, 1]} : vector<1x256xf32> to vector<1x16xf32>
      %c1_69 = arith.constant 1 : index
      %c12_70 = arith.constant 12 : index
      %c0_71 = arith.constant 0 : index
      %101 = vector.load %arg7[%c1_69, %c12_70, %c0_71] : memref<2x24x128xf32, #tpu.memory_space<vmem>>, vector<1x1x16xf32>
      %102 = vector.shape_cast %101 : vector<1x1x16xf32> to vector<1x16xf32>
      %103 = vector.shape_cast %100 : vector<1x16xf32> to vector<1x1x16xf32>
      tpu.vector_store %arg7[%c1_69, %c12_70, %c0_71], %103 {strides = array<i32>} : memref<2x24x128xf32, #tpu.memory_space<vmem>>, vector<1x1x16xf32>,
      %104 = vector.extract_strided_slice %18 {offsets = [0, 160], sizes = [1, 16], strides = [1, 1]} : vector<1x256xf32> to vector<1x16xf32>
      %c0_72 = arith.constant 0 : index
      %c13 = arith.constant 13 : index
      %c0_73 = arith.constant 0 : index
      %105 = vector.load %arg7[%c0_72, %c13, %c0_73] : memref<2x24x128xf32, #tpu.memory_space<vmem>>, vector<1x1x16xf32>
      %106 = vector.shape_cast %105 : vector<1x1x16xf32> to vector<1x16xf32>
      %107 = vector.shape_cast %104 : vector<1x16xf32> to vector<1x1x16xf32>
      tpu.vector_store %arg7[%c0_72, %c13, %c0_73], %107 {strides = array<i32>} : memref<2x24x128xf32, #tpu.memory_space<vmem>>, vector<1x1x16xf32>,
      %108 = vector.extract_strided_slice %21 {offsets = [0, 160], sizes = [1, 16], strides = [1, 1]} : vector<1x256xf32> to vector<1x16xf32>
      %c1_74 = arith.constant 1 : index
      %c13_75 = arith.constant 13 : index
      %c0_76 = arith.constant 0 : index
      %109 = vector.load %arg7[%c1_74, %c13_75, %c0_76] : memref<2x24x128xf32, #tpu.memory_space<vmem>>, vector<1x1x16xf32>
      %110 = vector.shape_cast %109 : vector<1x1x16xf32> to vector<1x16xf32>
      %111 = vector.shape_cast %108 : vector<1x16xf32> to vector<1x1x16xf32>
      tpu.vector_store %arg7[%c1_74, %c13_75, %c0_76], %111 {strides = array<i32>} : memref<2x24x128xf32, #tpu.memory_space<vmem>>, vector<1x1x16xf32>,
      %112 = vector.extract_strided_slice %18 {offsets = [0, 176], sizes = [1, 16], strides = [1, 1]} : vector<1x256xf32> to vector<1x16xf32>
      %c0_77 = arith.constant 0 : index
      %c14 = arith.constant 14 : index
      %c0_78 = arith.constant 0 : index
      %113 = vector.load %arg7[%c0_77, %c14, %c0_78] : memref<2x24x128xf32, #tpu.memory_space<vmem>>, vector<1x1x16xf32>
      %114 = vector.shape_cast %113 : vector<1x1x16xf32> to vector<1x16xf32>
      %115 = vector.shape_cast %112 : vector<1x16xf32> to vector<1x1x16xf32>
      tpu.vector_store %arg7[%c0_77, %c14, %c0_78], %115 {strides = array<i32>} : memref<2x24x128xf32, #tpu.memory_space<vmem>>, vector<1x1x16xf32>,
      %116 = vector.extract_strided_slice %21 {offsets = [0, 176], sizes = [1, 16], strides = [1, 1]} : vector<1x256xf32> to vector<1x16xf32>
      %c1_79 = arith.constant 1 : index
      %c14_80 = arith.constant 14 : index
      %c0_81 = arith.constant 0 : index
      %117 = vector.load %arg7[%c1_79, %c14_80, %c0_81] : memref<2x24x128xf32, #tpu.memory_space<vmem>>, vector<1x1x16xf32>
      %118 = vector.shape_cast %117 : vector<1x1x16xf32> to vector<1x16xf32>
      %119 = vector.shape_cast %116 : vector<1x16xf32> to vector<1x1x16xf32>
      tpu.vector_store %arg7[%c1_79, %c14_80, %c0_81], %119 {strides = array<i32>} : memref<2x24x128xf32, #tpu.memory_space<vmem>>, vector<1x1x16xf32>,
      %120 = vector.extract_strided_slice %18 {offsets = [0, 192], sizes = [1, 16], strides = [1, 1]} : vector<1x256xf32> to vector<1x16xf32>
      %c0_82 = arith.constant 0 : index
      %c15 = arith.constant 15 : index
      %c0_83 = arith.constant 0 : index
      %121 = vector.load %arg7[%c0_82, %c15, %c0_83] : memref<2x24x128xf32, #tpu.memory_space<vmem>>, vector<1x1x16xf32>
      %122 = vector.shape_cast %121 : vector<1x1x16xf32> to vector<1x16xf32>
      %123 = vector.shape_cast %120 : vector<1x16xf32> to vector<1x1x16xf32>
      tpu.vector_store %arg7[%c0_82, %c15, %c0_83], %123 {strides = array<i32>} : memref<2x24x128xf32, #tpu.memory_space<vmem>>, vector<1x1x16xf32>,
      %124 = vector.extract_strided_slice %21 {offsets = [0, 192], sizes = [1, 16], strides = [1, 1]} : vector<1x256xf32> to vector<1x16xf32>
      %c1_84 = arith.constant 1 : index
      %c15_85 = arith.constant 15 : index
      %c0_86 = arith.constant 0 : index
      %125 = vector.load %arg7[%c1_84, %c15_85, %c0_86] : memref<2x24x128xf32, #tpu.memory_space<vmem>>, vector<1x1x16xf32>
      %126 = vector.shape_cast %125 : vector<1x1x16xf32> to vector<1x16xf32>
      %127 = vector.shape_cast %124 : vector<1x16xf32> to vector<1x1x16xf32>
      tpu.vector_store %arg7[%c1_84, %c15_85, %c0_86], %127 {strides = array<i32>} : memref<2x24x128xf32, #tpu.memory_space<vmem>>, vector<1x1x16xf32>,
      %128 = vector.extract_strided_slice %18 {offsets = [0, 208], sizes = [1, 16], strides = [1, 1]} : vector<1x256xf32> to vector<1x16xf32>
      %c0_87 = arith.constant 0 : index
      %c16 = arith.constant 16 : index
      %c0_88 = arith.constant 0 : index
      %129 = vector.load %arg7[%c0_87, %c16, %c0_88] : memref<2x24x128xf32, #tpu.memory_space<vmem>>, vector<1x1x16xf32>
      %130 = vector.shape_cast %129 : vector<1x1x16xf32> to vector<1x16xf32>
      %131 = vector.shape_cast %128 : vector<1x16xf32> to vector<1x1x16xf32>
      tpu.vector_store %arg7[%c0_87, %c16, %c0_88], %131 {strides = array<i32>} : memref<2x24x128xf32, #tpu.memory_space<vmem>>, vector<1x1x16xf32>,
      %132 = vector.extract_strided_slice %21 {offsets = [0, 208], sizes = [1, 16], strides = [1, 1]} : vector<1x256xf32> to vector<1x16xf32>
      %c1_89 = arith.constant 1 : index
      %c16_90 = arith.constant 16 : index
      %c0_91 = arith.constant 0 : index
      %133 = vector.load %arg7[%c1_89, %c16_90, %c0_91] : memref<2x24x128xf32, #tpu.memory_space<vmem>>, vector<1x1x16xf32>
      %134 = vector.shape_cast %133 : vector<1x1x16xf32> to vector<1x16xf32>
      %135 = vector.shape_cast %132 : vector<1x16xf32> to vector<1x1x16xf32>
      tpu.vector_store %arg7[%c1_89, %c16_90, %c0_91], %135 {strides = array<i32>} : memref<2x24x128xf32, #tpu.memory_space<vmem>>, vector<1x1x16xf32>,
      %136 = vector.extract_strided_slice %18 {offsets = [0, 224], sizes = [1, 16], strides = [1, 1]} : vector<1x256xf32> to vector<1x16xf32>
      %c0_92 = arith.constant 0 : index
      %c17 = arith.constant 17 : index
      %c0_93 = arith.constant 0 : index
      %137 = vector.load %arg7[%c0_92, %c17, %c0_93] : memref<2x24x128xf32, #tpu.memory_space<vmem>>, vector<1x1x16xf32>
      %138 = vector.shape_cast %137 : vector<1x1x16xf32> to vector<1x16xf32>
      %139 = vector.shape_cast %136 : vector<1x16xf32> to vector<1x1x16xf32>
      tpu.vector_store %arg7[%c0_92, %c17, %c0_93], %139 {strides = array<i32>} : memref<2x24x128xf32, #tpu.memory_space<vmem>>, vector<1x1x16xf32>,
      %140 = vector.extract_strided_slice %21 {offsets = [0, 224], sizes = [1, 16], strides = [1, 1]} : vector<1x256xf32> to vector<1x16xf32>
      %c1_94 = arith.constant 1 : index
      %c17_95 = arith.constant 17 : index
      %c0_96 = arith.constant 0 : index
      %141 = vector.load %arg7[%c1_94, %c17_95, %c0_96] : memref<2x24x128xf32, #tpu.memory_space<vmem>>, vector<1x1x16xf32>
      %142 = vector.shape_cast %141 : vector<1x1x16xf32> to vector<1x16xf32>
      %143 = vector.shape_cast %140 : vector<1x16xf32> to vector<1x1x16xf32>
      tpu.vector_store %arg7[%c1_94, %c17_95, %c0_96], %143 {strides = array<i32>} : memref<2x24x128xf32, #tpu.memory_space<vmem>>, vector<1x1x16xf32>,
      %144 = vector.extract_strided_slice %18 {offsets = [0, 240], sizes = [1, 16], strides = [1, 1]} : vector<1x256xf32> to vector<1x16xf32>
      %c0_97 = arith.constant 0 : index
      %c18 = arith.constant 18 : index
      %c0_98 = arith.constant 0 : index
      %145 = vector.load %arg7[%c0_97, %c18, %c0_98] : memref<2x24x128xf32, #tpu.memory_space<vmem>>, vector<1x1x16xf32>
      %146 = vector.shape_cast %145 : vector<1x1x16xf32> to vector<1x16xf32>
      %147 = vector.shape_cast %144 : vector<1x16xf32> to vector<1x1x16xf32>
      tpu.vector_store %arg7[%c0_97, %c18, %c0_98], %147 {strides = array<i32>} : memref<2x24x128xf32, #tpu.memory_space<vmem>>, vector<1x1x16xf32>,
      %148 = vector.extract_strided_slice %21 {offsets = [0, 240], sizes = [1, 16], strides = [1, 1]} : vector<1x256xf32> to vector<1x16xf32>
      %c1_99 = arith.constant 1 : index
      %c18_100 = arith.constant 18 : index
      %c0_101 = arith.constant 0 : index
      %149 = vector.load %arg7[%c1_99, %c18_100, %c0_101] : memref<2x24x128xf32, #tpu.memory_space<vmem>>, vector<1x1x16xf32>
      %150 = vector.shape_cast %149 : vector<1x1x16xf32> to vector<1x16xf32>
      %151 = vector.shape_cast %148 : vector<1x16xf32> to vector<1x1x16xf32>
      tpu.vector_store %arg7[%c1_99, %c18_100, %c0_101], %151 {strides = array<i32>} : memref<2x24x128xf32, #tpu.memory_space<vmem>>, vector<1x1x16xf32>,
      %cst_102 = arith.constant 0.000000e+00 : f32
      %152 = vector.broadcast %cst_102 : f32 to vector<16x16xf32>
      %cst_103 = arith.constant 0.000000e+00 : f32
      %153 = vector.broadcast %cst_103 : f32 to vector<16x16xf32>
      %c0_104 = arith.constant 0 : index
      %c0_105 = arith.constant 0 : index
      %c0_106 = arith.constant 0 : index
      %154 = vector.load %arg7[%c0_104, %c0_105, %c0_106] : memref<2x24x128xf32, #tpu.memory_space<vmem>>, vector<1x24x128xf32>
      %155 = vector.shape_cast %154 : vector<1x24x128xf32> to vector<24x128xf32>
      %c3_i32 = arith.constant 3 : i32
      %156 = tpu.dynamic_rotate %155 by %c3_i32 dim 1 : vector<24x128xf32>, i32 -> vector<24x128xf32>
      %c2_i32 = arith.constant 2 : i32
      %157 = tpu.dynamic_rotate %155 by %c2_i32 dim 1 : vector<24x128xf32>, i32 -> vector<24x128xf32>
      %c1_i32 = arith.constant 1 : i32
      %158 = tpu.dynamic_rotate %155 by %c1_i32 dim 1 : vector<24x128xf32>, i32 -> vector<24x128xf32>
      %c127_i32 = arith.constant 127 : i32
      %159 = tpu.dynamic_rotate %155 by %c127_i32 dim 1 : vector<24x128xf32>, i32 -> vector<24x128xf32>
      %c126_i32 = arith.constant 126 : i32
      %160 = tpu.dynamic_rotate %155 by %c126_i32 dim 1 : vector<24x128xf32>, i32 -> vector<24x128xf32>
      %c125_i32 = arith.constant 125 : i32
      %161 = tpu.dynamic_rotate %155 by %c125_i32 dim 1 : vector<24x128xf32>, i32 -> vector<24x128xf32>
      %c0_107 = arith.constant 0 : index
      %162 = memref.load %arg2[%c0_107] : memref<98xf32, #tpu.memory_space<smem>>
      %163 = vector.broadcast %162 : f32 to vector<24x128xf32>
      %164 = arith.mulf %156, %163 : vector<24x128xf32>
      %c1_108 = arith.constant 1 : index
      %165 = memref.load %arg2[%c1_108] : memref<98xf32, #tpu.memory_space<smem>>
      %166 = vector.broadcast %165 : f32 to vector<24x128xf32>
      %167 = arith.mulf %157, %166 : vector<24x128xf32>
      %168 = arith.addf %164, %167 : vector<24x128xf32>
      %c2 = arith.constant 2 : index
      %169 = memref.load %arg2[%c2] : memref<98xf32, #tpu.memory_space<smem>>
      %170 = vector.broadcast %169 : f32 to vector<24x128xf32>
      %171 = arith.mulf %158, %170 : vector<24x128xf32>
      %172 = arith.addf %168, %171 : vector<24x128xf32>
      %c3_109 = arith.constant 3 : index
      %173 = memref.load %arg2[%c3_109] : memref<98xf32, #tpu.memory_space<smem>>
      %174 = vector.broadcast %173 : f32 to vector<24x128xf32>
      %175 = arith.mulf %155, %174 : vector<24x128xf32>
      %176 = arith.addf %172, %175 : vector<24x128xf32>
      %c4_110 = arith.constant 4 : index
      %177 = memref.load %arg2[%c4_110] : memref<98xf32, #tpu.memory_space<smem>>
      %178 = vector.broadcast %177 : f32 to vector<24x128xf32>
      %179 = arith.mulf %159, %178 : vector<24x128xf32>
      %180 = arith.addf %176, %179 : vector<24x128xf32>
      %c5_111 = arith.constant 5 : index
      %181 = memref.load %arg2[%c5_111] : memref<98xf32, #tpu.memory_space<smem>>
      %182 = vector.broadcast %181 : f32 to vector<24x128xf32>
      %183 = arith.mulf %160, %182 : vector<24x128xf32>
      %184 = arith.addf %180, %183 : vector<24x128xf32>
      %c6_112 = arith.constant 6 : index
      %185 = memref.load %arg2[%c6_112] : memref<98xf32, #tpu.memory_space<smem>>
      %186 = vector.broadcast %185 : f32 to vector<24x128xf32>
      %187 = arith.mulf %161, %186 : vector<24x128xf32>
      %188 = arith.addf %184, %187 : vector<24x128xf32>
      %189 = vector.extract_strided_slice %188 {offsets = [0, 0], sizes = [16, 16], strides = [1, 1]} : vector<24x128xf32> to vector<16x16xf32>
      %190 = arith.addf %152, %189 : vector<16x16xf32>
      %c7_113 = arith.constant 7 : index
      %191 = memref.load %arg2[%c7_113] : memref<98xf32, #tpu.memory_space<smem>>
      %192 = vector.broadcast %191 : f32 to vector<24x128xf32>
      %193 = arith.mulf %156, %192 : vector<24x128xf32>
      %c8_114 = arith.constant 8 : index
      %194 = memref.load %arg2[%c8_114] : memref<98xf32, #tpu.memory_space<smem>>
      %195 = vector.broadcast %194 : f32 to vector<24x128xf32>
      %196 = arith.mulf %157, %195 : vector<24x128xf32>
      %197 = arith.addf %193, %196 : vector<24x128xf32>
      %c9_115 = arith.constant 9 : index
      %198 = memref.load %arg2[%c9_115] : memref<98xf32, #tpu.memory_space<smem>>
      %199 = vector.broadcast %198 : f32 to vector<24x128xf32>
      %200 = arith.mulf %158, %199 : vector<24x128xf32>
      %201 = arith.addf %197, %200 : vector<24x128xf32>
      %c10_116 = arith.constant 10 : index
      %202 = memref.load %arg2[%c10_116] : memref<98xf32, #tpu.memory_space<smem>>
      %203 = vector.broadcast %202 : f32 to vector<24x128xf32>
      %204 = arith.mulf %155, %203 : vector<24x128xf32>
      %205 = arith.addf %201, %204 : vector<24x128xf32>
      %c11_117 = arith.constant 11 : index
      %206 = memref.load %arg2[%c11_117] : memref<98xf32, #tpu.memory_space<smem>>
      %207 = vector.broadcast %206 : f32 to vector<24x128xf32>
      %208 = arith.mulf %159, %207 : vector<24x128xf32>
      %209 = arith.addf %205, %208 : vector<24x128xf32>
      %c12_118 = arith.constant 12 : index
      %210 = memref.load %arg2[%c12_118] : memref<98xf32, #tpu.memory_space<smem>>
      %211 = vector.broadcast %210 : f32 to vector<24x128xf32>
      %212 = arith.mulf %160, %211 : vector<24x128xf32>
      %213 = arith.addf %209, %212 : vector<24x128xf32>
      %c13_119 = arith.constant 13 : index
      %214 = memref.load %arg2[%c13_119] : memref<98xf32, #tpu.memory_space<smem>>
      %215 = vector.broadcast %214 : f32 to vector<24x128xf32>
      %216 = arith.mulf %161, %215 : vector<24x128xf32>
      %217 = arith.addf %213, %216 : vector<24x128xf32>
      %218 = vector.extract_strided_slice %217 {offsets = [1, 0], sizes = [16, 16], strides = [1, 1]} : vector<24x128xf32> to vector<16x16xf32>
      %219 = arith.addf %153, %218 : vector<16x16xf32>
      %c14_120 = arith.constant 14 : index
      %220 = memref.load %arg2[%c14_120] : memref<98xf32, #tpu.memory_space<smem>>
      %221 = vector.broadcast %220 : f32 to vector<24x128xf32>
      %222 = arith.mulf %156, %221 : vector<24x128xf32>
      %c15_121 = arith.constant 15 : index
      %223 = memref.load %arg2[%c15_121] : memref<98xf32, #tpu.memory_space<smem>>
      %224 = vector.broadcast %223 : f32 to vector<24x128xf32>
      %225 = arith.mulf %157, %224 : vector<24x128xf32>
      %226 = arith.addf %222, %225 : vector<24x128xf32>
      %c16_122 = arith.constant 16 : index
      %227 = memref.load %arg2[%c16_122] : memref<98xf32, #tpu.memory_space<smem>>
      %228 = vector.broadcast %227 : f32 to vector<24x128xf32>
      %229 = arith.mulf %158, %228 : vector<24x128xf32>
      %230 = arith.addf %226, %229 : vector<24x128xf32>
      %c17_123 = arith.constant 17 : index
      %231 = memref.load %arg2[%c17_123] : memref<98xf32, #tpu.memory_space<smem>>
      %232 = vector.broadcast %231 : f32 to vector<24x128xf32>
      %233 = arith.mulf %155, %232 : vector<24x128xf32>
      %234 = arith.addf %230, %233 : vector<24x128xf32>
      %c18_124 = arith.constant 18 : index
      %235 = memref.load %arg2[%c18_124] : memref<98xf32, #tpu.memory_space<smem>>
      %236 = vector.broadcast %235 : f32 to vector<24x128xf32>
      %237 = arith.mulf %159, %236 : vector<24x128xf32>
      %238 = arith.addf %234, %237 : vector<24x128xf32>
      %c19 = arith.constant 19 : index
      %239 = memref.load %arg2[%c19] : memref<98xf32, #tpu.memory_space<smem>>
      %240 = vector.broadcast %239 : f32 to vector<24x128xf32>
      %241 = arith.mulf %160, %240 : vector<24x128xf32>
      %242 = arith.addf %238, %241 : vector<24x128xf32>
      %c20 = arith.constant 20 : index
      %243 = memref.load %arg2[%c20] : memref<98xf32, #tpu.memory_space<smem>>
      %244 = vector.broadcast %243 : f32 to vector<24x128xf32>
      %245 = arith.mulf %161, %244 : vector<24x128xf32>
      %246 = arith.addf %242, %245 : vector<24x128xf32>
      %247 = vector.extract_strided_slice %246 {offsets = [2, 0], sizes = [16, 16], strides = [1, 1]} : vector<24x128xf32> to vector<16x16xf32>
      %248 = arith.addf %190, %247 : vector<16x16xf32>
      %c21 = arith.constant 21 : index
      %249 = memref.load %arg2[%c21] : memref<98xf32, #tpu.memory_space<smem>>
      %250 = vector.broadcast %249 : f32 to vector<24x128xf32>
      %251 = arith.mulf %156, %250 : vector<24x128xf32>
      %c22 = arith.constant 22 : index
      %252 = memref.load %arg2[%c22] : memref<98xf32, #tpu.memory_space<smem>>
      %253 = vector.broadcast %252 : f32 to vector<24x128xf32>
      %254 = arith.mulf %157, %253 : vector<24x128xf32>
      %255 = arith.addf %251, %254 : vector<24x128xf32>
      %c23 = arith.constant 23 : index
      %256 = memref.load %arg2[%c23] : memref<98xf32, #tpu.memory_space<smem>>
      %257 = vector.broadcast %256 : f32 to vector<24x128xf32>
      %258 = arith.mulf %158, %257 : vector<24x128xf32>
      %259 = arith.addf %255, %258 : vector<24x128xf32>
      %c24 = arith.constant 24 : index
      %260 = memref.load %arg2[%c24] : memref<98xf32, #tpu.memory_space<smem>>
      %261 = vector.broadcast %260 : f32 to vector<24x128xf32>
      %262 = arith.mulf %155, %261 : vector<24x128xf32>
      %263 = arith.addf %259, %262 : vector<24x128xf32>
      %c25 = arith.constant 25 : index
      %264 = memref.load %arg2[%c25] : memref<98xf32, #tpu.memory_space<smem>>
      %265 = vector.broadcast %264 : f32 to vector<24x128xf32>
      %266 = arith.mulf %159, %265 : vector<24x128xf32>
      %267 = arith.addf %263, %266 : vector<24x128xf32>
      %c26 = arith.constant 26 : index
      %268 = memref.load %arg2[%c26] : memref<98xf32, #tpu.memory_space<smem>>
      %269 = vector.broadcast %268 : f32 to vector<24x128xf32>
      %270 = arith.mulf %160, %269 : vector<24x128xf32>
      %271 = arith.addf %267, %270 : vector<24x128xf32>
      %c27 = arith.constant 27 : index
      %272 = memref.load %arg2[%c27] : memref<98xf32, #tpu.memory_space<smem>>
      %273 = vector.broadcast %272 : f32 to vector<24x128xf32>
      %274 = arith.mulf %161, %273 : vector<24x128xf32>
      %275 = arith.addf %271, %274 : vector<24x128xf32>
      %276 = vector.extract_strided_slice %275 {offsets = [3, 0], sizes = [16, 16], strides = [1, 1]} : vector<24x128xf32> to vector<16x16xf32>
      %277 = arith.addf %219, %276 : vector<16x16xf32>
      %c28 = arith.constant 28 : index
      %278 = memref.load %arg2[%c28] : memref<98xf32, #tpu.memory_space<smem>>
      %279 = vector.broadcast %278 : f32 to vector<24x128xf32>
      %280 = arith.mulf %156, %279 : vector<24x128xf32>
      %c29 = arith.constant 29 : index
      %281 = memref.load %arg2[%c29] : memref<98xf32, #tpu.memory_space<smem>>
      %282 = vector.broadcast %281 : f32 to vector<24x128xf32>
      %283 = arith.mulf %157, %282 : vector<24x128xf32>
      %284 = arith.addf %280, %283 : vector<24x128xf32>
      %c30 = arith.constant 30 : index
      %285 = memref.load %arg2[%c30] : memref<98xf32, #tpu.memory_space<smem>>
      %286 = vector.broadcast %285 : f32 to vector<24x128xf32>
      %287 = arith.mulf %158, %286 : vector<24x128xf32>
      %288 = arith.addf %284, %287 : vector<24x128xf32>
      %c31 = arith.constant 31 : index
      %289 = memref.load %arg2[%c31] : memref<98xf32, #tpu.memory_space<smem>>
      %290 = vector.broadcast %289 : f32 to vector<24x128xf32>
      %291 = arith.mulf %155, %290 : vector<24x128xf32>
      %292 = arith.addf %288, %291 : vector<24x128xf32>
      %c32 = arith.constant 32 : index
      %293 = memref.load %arg2[%c32] : memref<98xf32, #tpu.memory_space<smem>>
      %294 = vector.broadcast %293 : f32 to vector<24x128xf32>
      %295 = arith.mulf %159, %294 : vector<24x128xf32>
      %296 = arith.addf %292, %295 : vector<24x128xf32>
      %c33 = arith.constant 33 : index
      %297 = memref.load %arg2[%c33] : memref<98xf32, #tpu.memory_space<smem>>
      %298 = vector.broadcast %297 : f32 to vector<24x128xf32>
      %299 = arith.mulf %160, %298 : vector<24x128xf32>
      %300 = arith.addf %296, %299 : vector<24x128xf32>
      %c34 = arith.constant 34 : index
      %301 = memref.load %arg2[%c34] : memref<98xf32, #tpu.memory_space<smem>>
      %302 = vector.broadcast %301 : f32 to vector<24x128xf32>
      %303 = arith.mulf %161, %302 : vector<24x128xf32>
      %304 = arith.addf %300, %303 : vector<24x128xf32>
      %305 = vector.extract_strided_slice %304 {offsets = [4, 0], sizes = [16, 16], strides = [1, 1]} : vector<24x128xf32> to vector<16x16xf32>
      %306 = arith.addf %248, %305 : vector<16x16xf32>
      %c35 = arith.constant 35 : index
      %307 = memref.load %arg2[%c35] : memref<98xf32, #tpu.memory_space<smem>>
      %308 = vector.broadcast %307 : f32 to vector<24x128xf32>
      %309 = arith.mulf %156, %308 : vector<24x128xf32>
      %c36 = arith.constant 36 : index
      %310 = memref.load %arg2[%c36] : memref<98xf32, #tpu.memory_space<smem>>
      %311 = vector.broadcast %310 : f32 to vector<24x128xf32>
      %312 = arith.mulf %157, %311 : vector<24x128xf32>
      %313 = arith.addf %309, %312 : vector<24x128xf32>
      %c37 = arith.constant 37 : index
      %314 = memref.load %arg2[%c37] : memref<98xf32, #tpu.memory_space<smem>>
      %315 = vector.broadcast %314 : f32 to vector<24x128xf32>
      %316 = arith.mulf %158, %315 : vector<24x128xf32>
      %317 = arith.addf %313, %316 : vector<24x128xf32>
      %c38 = arith.constant 38 : index
      %318 = memref.load %arg2[%c38] : memref<98xf32, #tpu.memory_space<smem>>
      %319 = vector.broadcast %318 : f32 to vector<24x128xf32>
      %320 = arith.mulf %155, %319 : vector<24x128xf32>
      %321 = arith.addf %317, %320 : vector<24x128xf32>
      %c39 = arith.constant 39 : index
      %322 = memref.load %arg2[%c39] : memref<98xf32, #tpu.memory_space<smem>>
      %323 = vector.broadcast %322 : f32 to vector<24x128xf32>
      %324 = arith.mulf %159, %323 : vector<24x128xf32>
      %325 = arith.addf %321, %324 : vector<24x128xf32>
      %c40 = arith.constant 40 : index
      %326 = memref.load %arg2[%c40] : memref<98xf32, #tpu.memory_space<smem>>
      %327 = vector.broadcast %326 : f32 to vector<24x128xf32>
      %328 = arith.mulf %160, %327 : vector<24x128xf32>
      %329 = arith.addf %325, %328 : vector<24x128xf32>
      %c41 = arith.constant 41 : index
      %330 = memref.load %arg2[%c41] : memref<98xf32, #tpu.memory_space<smem>>
      %331 = vector.broadcast %330 : f32 to vector<24x128xf32>
      %332 = arith.mulf %161, %331 : vector<24x128xf32>
      %333 = arith.addf %329, %332 : vector<24x128xf32>
      %334 = vector.extract_strided_slice %333 {offsets = [5, 0], sizes = [16, 16], strides = [1, 1]} : vector<24x128xf32> to vector<16x16xf32>
      %335 = arith.addf %277, %334 : vector<16x16xf32>
      %c42 = arith.constant 42 : index
      %336 = memref.load %arg2[%c42] : memref<98xf32, #tpu.memory_space<smem>>
      %337 = vector.broadcast %336 : f32 to vector<24x128xf32>
      %338 = arith.mulf %156, %337 : vector<24x128xf32>
      %c43 = arith.constant 43 : index
      %339 = memref.load %arg2[%c43] : memref<98xf32, #tpu.memory_space<smem>>
      %340 = vector.broadcast %339 : f32 to vector<24x128xf32>
      %341 = arith.mulf %157, %340 : vector<24x128xf32>
      %342 = arith.addf %338, %341 : vector<24x128xf32>
      %c44 = arith.constant 44 : index
      %343 = memref.load %arg2[%c44] : memref<98xf32, #tpu.memory_space<smem>>
      %344 = vector.broadcast %343 : f32 to vector<24x128xf32>
      %345 = arith.mulf %158, %344 : vector<24x128xf32>
      %346 = arith.addf %342, %345 : vector<24x128xf32>
      %c45 = arith.constant 45 : index
      %347 = memref.load %arg2[%c45] : memref<98xf32, #tpu.memory_space<smem>>
      %348 = vector.broadcast %347 : f32 to vector<24x128xf32>
      %349 = arith.mulf %155, %348 : vector<24x128xf32>
      %350 = arith.addf %346, %349 : vector<24x128xf32>
      %c46 = arith.constant 46 : index
      %351 = memref.load %arg2[%c46] : memref<98xf32, #tpu.memory_space<smem>>
      %352 = vector.broadcast %351 : f32 to vector<24x128xf32>
      %353 = arith.mulf %159, %352 : vector<24x128xf32>
      %354 = arith.addf %350, %353 : vector<24x128xf32>
      %c47 = arith.constant 47 : index
      %355 = memref.load %arg2[%c47] : memref<98xf32, #tpu.memory_space<smem>>
      %356 = vector.broadcast %355 : f32 to vector<24x128xf32>
      %357 = arith.mulf %160, %356 : vector<24x128xf32>
      %358 = arith.addf %354, %357 : vector<24x128xf32>
      %c48 = arith.constant 48 : index
      %359 = memref.load %arg2[%c48] : memref<98xf32, #tpu.memory_space<smem>>
      %360 = vector.broadcast %359 : f32 to vector<24x128xf32>
      %361 = arith.mulf %161, %360 : vector<24x128xf32>
      %362 = arith.addf %358, %361 : vector<24x128xf32>
      %363 = vector.extract_strided_slice %362 {offsets = [6, 0], sizes = [16, 16], strides = [1, 1]} : vector<24x128xf32> to vector<16x16xf32>
      %364 = arith.addf %306, %363 : vector<16x16xf32>
      %c1_125 = arith.constant 1 : index
      %c0_126 = arith.constant 0 : index
      %c0_127 = arith.constant 0 : index
      %365 = vector.load %arg7[%c1_125, %c0_126, %c0_127] : memref<2x24x128xf32, #tpu.memory_space<vmem>>, vector<1x24x128xf32>
      %366 = vector.shape_cast %365 : vector<1x24x128xf32> to vector<24x128xf32>
      %c3_i32_128 = arith.constant 3 : i32
      %367 = tpu.dynamic_rotate %366 by %c3_i32_128 dim 1 : vector<24x128xf32>, i32 -> vector<24x128xf32>
      %c2_i32_129 = arith.constant 2 : i32
      %368 = tpu.dynamic_rotate %366 by %c2_i32_129 dim 1 : vector<24x128xf32>, i32 -> vector<24x128xf32>
      %c1_i32_130 = arith.constant 1 : i32
      %369 = tpu.dynamic_rotate %366 by %c1_i32_130 dim 1 : vector<24x128xf32>, i32 -> vector<24x128xf32>
      %c127_i32_131 = arith.constant 127 : i32
      %370 = tpu.dynamic_rotate %366 by %c127_i32_131 dim 1 : vector<24x128xf32>, i32 -> vector<24x128xf32>
      %c126_i32_132 = arith.constant 126 : i32
      %371 = tpu.dynamic_rotate %366 by %c126_i32_132 dim 1 : vector<24x128xf32>, i32 -> vector<24x128xf32>
      %c125_i32_133 = arith.constant 125 : i32
      %372 = tpu.dynamic_rotate %366 by %c125_i32_133 dim 1 : vector<24x128xf32>, i32 -> vector<24x128xf32>
      %c49 = arith.constant 49 : index
      %373 = memref.load %arg2[%c49] : memref<98xf32, #tpu.memory_space<smem>>
      %374 = vector.broadcast %373 : f32 to vector<24x128xf32>
      %375 = arith.mulf %367, %374 : vector<24x128xf32>
      %c50 = arith.constant 50 : index
      %376 = memref.load %arg2[%c50] : memref<98xf32, #tpu.memory_space<smem>>
      %377 = vector.broadcast %376 : f32 to vector<24x128xf32>
      %378 = arith.mulf %368, %377 : vector<24x128xf32>
      %379 = arith.addf %375, %378 : vector<24x128xf32>
      %c51 = arith.constant 51 : index
      %380 = memref.load %arg2[%c51] : memref<98xf32, #tpu.memory_space<smem>>
      %381 = vector.broadcast %380 : f32 to vector<24x128xf32>
      %382 = arith.mulf %369, %381 : vector<24x128xf32>
      %383 = arith.addf %379, %382 : vector<24x128xf32>
      %c52 = arith.constant 52 : index
      %384 = memref.load %arg2[%c52] : memref<98xf32, #tpu.memory_space<smem>>
      %385 = vector.broadcast %384 : f32 to vector<24x128xf32>
      %386 = arith.mulf %366, %385 : vector<24x128xf32>
      %387 = arith.addf %383, %386 : vector<24x128xf32>
      %c53 = arith.constant 53 : index
      %388 = memref.load %arg2[%c53] : memref<98xf32, #tpu.memory_space<smem>>
      %389 = vector.broadcast %388 : f32 to vector<24x128xf32>
      %390 = arith.mulf %370, %389 : vector<24x128xf32>
      %391 = arith.addf %387, %390 : vector<24x128xf32>
      %c54 = arith.constant 54 : index
      %392 = memref.load %arg2[%c54] : memref<98xf32, #tpu.memory_space<smem>>
      %393 = vector.broadcast %392 : f32 to vector<24x128xf32>
      %394 = arith.mulf %371, %393 : vector<24x128xf32>
      %395 = arith.addf %391, %394 : vector<24x128xf32>
      %c55 = arith.constant 55 : index
      %396 = memref.load %arg2[%c55] : memref<98xf32, #tpu.memory_space<smem>>
      %397 = vector.broadcast %396 : f32 to vector<24x128xf32>
      %398 = arith.mulf %372, %397 : vector<24x128xf32>
      %399 = arith.addf %395, %398 : vector<24x128xf32>
      %400 = vector.extract_strided_slice %399 {offsets = [0, 0], sizes = [16, 16], strides = [1, 1]} : vector<24x128xf32> to vector<16x16xf32>
      %401 = arith.addf %335, %400 : vector<16x16xf32>
      %c56 = arith.constant 56 : index
      %402 = memref.load %arg2[%c56] : memref<98xf32, #tpu.memory_space<smem>>
      %403 = vector.broadcast %402 : f32 to vector<24x128xf32>
      %404 = arith.mulf %367, %403 : vector<24x128xf32>
      %c57 = arith.constant 57 : index
      %405 = memref.load %arg2[%c57] : memref<98xf32, #tpu.memory_space<smem>>
      %406 = vector.broadcast %405 : f32 to vector<24x128xf32>
      %407 = arith.mulf %368, %406 : vector<24x128xf32>
      %408 = arith.addf %404, %407 : vector<24x128xf32>
      %c58 = arith.constant 58 : index
      %409 = memref.load %arg2[%c58] : memref<98xf32, #tpu.memory_space<smem>>
      %410 = vector.broadcast %409 : f32 to vector<24x128xf32>
      %411 = arith.mulf %369, %410 : vector<24x128xf32>
      %412 = arith.addf %408, %411 : vector<24x128xf32>
      %c59 = arith.constant 59 : index
      %413 = memref.load %arg2[%c59] : memref<98xf32, #tpu.memory_space<smem>>
      %414 = vector.broadcast %413 : f32 to vector<24x128xf32>
      %415 = arith.mulf %366, %414 : vector<24x128xf32>
      %416 = arith.addf %412, %415 : vector<24x128xf32>
      %c60 = arith.constant 60 : index
      %417 = memref.load %arg2[%c60] : memref<98xf32, #tpu.memory_space<smem>>
      %418 = vector.broadcast %417 : f32 to vector<24x128xf32>
      %419 = arith.mulf %370, %418 : vector<24x128xf32>
      %420 = arith.addf %416, %419 : vector<24x128xf32>
      %c61 = arith.constant 61 : index
      %421 = memref.load %arg2[%c61] : memref<98xf32, #tpu.memory_space<smem>>
      %422 = vector.broadcast %421 : f32 to vector<24x128xf32>
      %423 = arith.mulf %371, %422 : vector<24x128xf32>
      %424 = arith.addf %420, %423 : vector<24x128xf32>
      %c62 = arith.constant 62 : index
      %425 = memref.load %arg2[%c62] : memref<98xf32, #tpu.memory_space<smem>>
      %426 = vector.broadcast %425 : f32 to vector<24x128xf32>
      %427 = arith.mulf %372, %426 : vector<24x128xf32>
      %428 = arith.addf %424, %427 : vector<24x128xf32>
      %429 = vector.extract_strided_slice %428 {offsets = [1, 0], sizes = [16, 16], strides = [1, 1]} : vector<24x128xf32> to vector<16x16xf32>
      %430 = arith.addf %364, %429 : vector<16x16xf32>
      %c63 = arith.constant 63 : index
      %431 = memref.load %arg2[%c63] : memref<98xf32, #tpu.memory_space<smem>>
      %432 = vector.broadcast %431 : f32 to vector<24x128xf32>
      %433 = arith.mulf %367, %432 : vector<24x128xf32>
      %c64 = arith.constant 64 : index
      %434 = memref.load %arg2[%c64] : memref<98xf32, #tpu.memory_space<smem>>
      %435 = vector.broadcast %434 : f32 to vector<24x128xf32>
      %436 = arith.mulf %368, %435 : vector<24x128xf32>
      %437 = arith.addf %433, %436 : vector<24x128xf32>
      %c65 = arith.constant 65 : index
      %438 = memref.load %arg2[%c65] : memref<98xf32, #tpu.memory_space<smem>>
      %439 = vector.broadcast %438 : f32 to vector<24x128xf32>
      %440 = arith.mulf %369, %439 : vector<24x128xf32>
      %441 = arith.addf %437, %440 : vector<24x128xf32>
      %c66 = arith.constant 66 : index
      %442 = memref.load %arg2[%c66] : memref<98xf32, #tpu.memory_space<smem>>
      %443 = vector.broadcast %442 : f32 to vector<24x128xf32>
      %444 = arith.mulf %366, %443 : vector<24x128xf32>
      %445 = arith.addf %441, %444 : vector<24x128xf32>
      %c67 = arith.constant 67 : index
      %446 = memref.load %arg2[%c67] : memref<98xf32, #tpu.memory_space<smem>>
      %447 = vector.broadcast %446 : f32 to vector<24x128xf32>
      %448 = arith.mulf %370, %447 : vector<24x128xf32>
      %449 = arith.addf %445, %448 : vector<24x128xf32>
      %c68 = arith.constant 68 : index
      %450 = memref.load %arg2[%c68] : memref<98xf32, #tpu.memory_space<smem>>
      %451 = vector.broadcast %450 : f32 to vector<24x128xf32>
      %452 = arith.mulf %371, %451 : vector<24x128xf32>
      %453 = arith.addf %449, %452 : vector<24x128xf32>
      %c69 = arith.constant 69 : index
      %454 = memref.load %arg2[%c69] : memref<98xf32, #tpu.memory_space<smem>>
      %455 = vector.broadcast %454 : f32 to vector<24x128xf32>
      %456 = arith.mulf %372, %455 : vector<24x128xf32>
      %457 = arith.addf %453, %456 : vector<24x128xf32>
      %458 = vector.extract_strided_slice %457 {offsets = [2, 0], sizes = [16, 16], strides = [1, 1]} : vector<24x128xf32> to vector<16x16xf32>
      %459 = arith.addf %401, %458 : vector<16x16xf32>
      %c70 = arith.constant 70 : index
      %460 = memref.load %arg2[%c70] : memref<98xf32, #tpu.memory_space<smem>>
      %461 = vector.broadcast %460 : f32 to vector<24x128xf32>
      %462 = arith.mulf %367, %461 : vector<24x128xf32>
      %c71 = arith.constant 71 : index
      %463 = memref.load %arg2[%c71] : memref<98xf32, #tpu.memory_space<smem>>
      %464 = vector.broadcast %463 : f32 to vector<24x128xf32>
      %465 = arith.mulf %368, %464 : vector<24x128xf32>
      %466 = arith.addf %462, %465 : vector<24x128xf32>
      %c72 = arith.constant 72 : index
      %467 = memref.load %arg2[%c72] : memref<98xf32, #tpu.memory_space<smem>>
      %468 = vector.broadcast %467 : f32 to vector<24x128xf32>
      %469 = arith.mulf %369, %468 : vector<24x128xf32>
      %470 = arith.addf %466, %469 : vector<24x128xf32>
      %c73 = arith.constant 73 : index
      %471 = memref.load %arg2[%c73] : memref<98xf32, #tpu.memory_space<smem>>
      %472 = vector.broadcast %471 : f32 to vector<24x128xf32>
      %473 = arith.mulf %366, %472 : vector<24x128xf32>
      %474 = arith.addf %470, %473 : vector<24x128xf32>
      %c74 = arith.constant 74 : index
      %475 = memref.load %arg2[%c74] : memref<98xf32, #tpu.memory_space<smem>>
      %476 = vector.broadcast %475 : f32 to vector<24x128xf32>
      %477 = arith.mulf %370, %476 : vector<24x128xf32>
      %478 = arith.addf %474, %477 : vector<24x128xf32>
      %c75 = arith.constant 75 : index
      %479 = memref.load %arg2[%c75] : memref<98xf32, #tpu.memory_space<smem>>
      %480 = vector.broadcast %479 : f32 to vector<24x128xf32>
      %481 = arith.mulf %371, %480 : vector<24x128xf32>
      %482 = arith.addf %478, %481 : vector<24x128xf32>
      %c76 = arith.constant 76 : index
      %483 = memref.load %arg2[%c76] : memref<98xf32, #tpu.memory_space<smem>>
      %484 = vector.broadcast %483 : f32 to vector<24x128xf32>
      %485 = arith.mulf %372, %484 : vector<24x128xf32>
      %486 = arith.addf %482, %485 : vector<24x128xf32>
      %487 = vector.extract_strided_slice %486 {offsets = [3, 0], sizes = [16, 16], strides = [1, 1]} : vector<24x128xf32> to vector<16x16xf32>
      %488 = arith.addf %430, %487 : vector<16x16xf32>
      %c77 = arith.constant 77 : index
      %489 = memref.load %arg2[%c77] : memref<98xf32, #tpu.memory_space<smem>>
      %490 = vector.broadcast %489 : f32 to vector<24x128xf32>
      %491 = arith.mulf %367, %490 : vector<24x128xf32>
      %c78 = arith.constant 78 : index
      %492 = memref.load %arg2[%c78] : memref<98xf32, #tpu.memory_space<smem>>
      %493 = vector.broadcast %492 : f32 to vector<24x128xf32>
      %494 = arith.mulf %368, %493 : vector<24x128xf32>
      %495 = arith.addf %491, %494 : vector<24x128xf32>
      %c79 = arith.constant 79 : index
      %496 = memref.load %arg2[%c79] : memref<98xf32, #tpu.memory_space<smem>>
      %497 = vector.broadcast %496 : f32 to vector<24x128xf32>
      %498 = arith.mulf %369, %497 : vector<24x128xf32>
      %499 = arith.addf %495, %498 : vector<24x128xf32>
      %c80 = arith.constant 80 : index
      %500 = memref.load %arg2[%c80] : memref<98xf32, #tpu.memory_space<smem>>
      %501 = vector.broadcast %500 : f32 to vector<24x128xf32>
      %502 = arith.mulf %366, %501 : vector<24x128xf32>
      %503 = arith.addf %499, %502 : vector<24x128xf32>
      %c81 = arith.constant 81 : index
      %504 = memref.load %arg2[%c81] : memref<98xf32, #tpu.memory_space<smem>>
      %505 = vector.broadcast %504 : f32 to vector<24x128xf32>
      %506 = arith.mulf %370, %505 : vector<24x128xf32>
      %507 = arith.addf %503, %506 : vector<24x128xf32>
      %c82 = arith.constant 82 : index
      %508 = memref.load %arg2[%c82] : memref<98xf32, #tpu.memory_space<smem>>
      %509 = vector.broadcast %508 : f32 to vector<24x128xf32>
      %510 = arith.mulf %371, %509 : vector<24x128xf32>
      %511 = arith.addf %507, %510 : vector<24x128xf32>
      %c83 = arith.constant 83 : index
      %512 = memref.load %arg2[%c83] : memref<98xf32, #tpu.memory_space<smem>>
      %513 = vector.broadcast %512 : f32 to vector<24x128xf32>
      %514 = arith.mulf %372, %513 : vector<24x128xf32>
      %515 = arith.addf %511, %514 : vector<24x128xf32>
      %516 = vector.extract_strided_slice %515 {offsets = [4, 0], sizes = [16, 16], strides = [1, 1]} : vector<24x128xf32> to vector<16x16xf32>
      %517 = arith.addf %459, %516 : vector<16x16xf32>
      %c84 = arith.constant 84 : index
      %518 = memref.load %arg2[%c84] : memref<98xf32, #tpu.memory_space<smem>>
      %519 = vector.broadcast %518 : f32 to vector<24x128xf32>
      %520 = arith.mulf %367, %519 : vector<24x128xf32>
      %c85 = arith.constant 85 : index
      %521 = memref.load %arg2[%c85] : memref<98xf32, #tpu.memory_space<smem>>
      %522 = vector.broadcast %521 : f32 to vector<24x128xf32>
      %523 = arith.mulf %368, %522 : vector<24x128xf32>
      %524 = arith.addf %520, %523 : vector<24x128xf32>
      %c86 = arith.constant 86 : index
      %525 = memref.load %arg2[%c86] : memref<98xf32, #tpu.memory_space<smem>>
      %526 = vector.broadcast %525 : f32 to vector<24x128xf32>
      %527 = arith.mulf %369, %526 : vector<24x128xf32>
      %528 = arith.addf %524, %527 : vector<24x128xf32>
      %c87 = arith.constant 87 : index
      %529 = memref.load %arg2[%c87] : memref<98xf32, #tpu.memory_space<smem>>
      %530 = vector.broadcast %529 : f32 to vector<24x128xf32>
      %531 = arith.mulf %366, %530 : vector<24x128xf32>
      %532 = arith.addf %528, %531 : vector<24x128xf32>
      %c88 = arith.constant 88 : index
      %533 = memref.load %arg2[%c88] : memref<98xf32, #tpu.memory_space<smem>>
      %534 = vector.broadcast %533 : f32 to vector<24x128xf32>
      %535 = arith.mulf %370, %534 : vector<24x128xf32>
      %536 = arith.addf %532, %535 : vector<24x128xf32>
      %c89 = arith.constant 89 : index
      %537 = memref.load %arg2[%c89] : memref<98xf32, #tpu.memory_space<smem>>
      %538 = vector.broadcast %537 : f32 to vector<24x128xf32>
      %539 = arith.mulf %371, %538 : vector<24x128xf32>
      %540 = arith.addf %536, %539 : vector<24x128xf32>
      %c90 = arith.constant 90 : index
      %541 = memref.load %arg2[%c90] : memref<98xf32, #tpu.memory_space<smem>>
      %542 = vector.broadcast %541 : f32 to vector<24x128xf32>
      %543 = arith.mulf %372, %542 : vector<24x128xf32>
      %544 = arith.addf %540, %543 : vector<24x128xf32>
      %545 = vector.extract_strided_slice %544 {offsets = [5, 0], sizes = [16, 16], strides = [1, 1]} : vector<24x128xf32> to vector<16x16xf32>
      %546 = arith.addf %488, %545 : vector<16x16xf32>
      %c91 = arith.constant 91 : index
      %547 = memref.load %arg2[%c91] : memref<98xf32, #tpu.memory_space<smem>>
      %548 = vector.broadcast %547 : f32 to vector<24x128xf32>
      %549 = arith.mulf %367, %548 : vector<24x128xf32>
      %c92 = arith.constant 92 : index
      %550 = memref.load %arg2[%c92] : memref<98xf32, #tpu.memory_space<smem>>
      %551 = vector.broadcast %550 : f32 to vector<24x128xf32>
      %552 = arith.mulf %368, %551 : vector<24x128xf32>
      %553 = arith.addf %549, %552 : vector<24x128xf32>
      %c93 = arith.constant 93 : index
      %554 = memref.load %arg2[%c93] : memref<98xf32, #tpu.memory_space<smem>>
      %555 = vector.broadcast %554 : f32 to vector<24x128xf32>
      %556 = arith.mulf %369, %555 : vector<24x128xf32>
      %557 = arith.addf %553, %556 : vector<24x128xf32>
      %c94 = arith.constant 94 : index
      %558 = memref.load %arg2[%c94] : memref<98xf32, #tpu.memory_space<smem>>
      %559 = vector.broadcast %558 : f32 to vector<24x128xf32>
      %560 = arith.mulf %366, %559 : vector<24x128xf32>
      %561 = arith.addf %557, %560 : vector<24x128xf32>
      %c95 = arith.constant 95 : index
      %562 = memref.load %arg2[%c95] : memref<98xf32, #tpu.memory_space<smem>>
      %563 = vector.broadcast %562 : f32 to vector<24x128xf32>
      %564 = arith.mulf %370, %563 : vector<24x128xf32>
      %565 = arith.addf %561, %564 : vector<24x128xf32>
      %c96 = arith.constant 96 : index
      %566 = memref.load %arg2[%c96] : memref<98xf32, #tpu.memory_space<smem>>
      %567 = vector.broadcast %566 : f32 to vector<24x128xf32>
      %568 = arith.mulf %371, %567 : vector<24x128xf32>
      %569 = arith.addf %565, %568 : vector<24x128xf32>
      %c97 = arith.constant 97 : index
      %570 = memref.load %arg2[%c97] : memref<98xf32, #tpu.memory_space<smem>>
      %571 = vector.broadcast %570 : f32 to vector<24x128xf32>
      %572 = arith.mulf %372, %571 : vector<24x128xf32>
      %573 = arith.addf %569, %572 : vector<24x128xf32>
      %574 = vector.extract_strided_slice %573 {offsets = [6, 0], sizes = [16, 16], strides = [1, 1]} : vector<24x128xf32> to vector<16x16xf32>
      %575 = arith.addf %517, %574 : vector<16x16xf32>
      %576 = arith.addf %546, %575 : vector<16x16xf32>
      %577 = arith.negf %576 : vector<16x16xf32>
      %578 = math.exp %577 : vector<16x16xf32>
      %cst_134 = arith.constant 1.000000e+00 : f32
      %579 = vector.broadcast %cst_134 : f32 to vector<16x16xf32>
      %580 = arith.addf %579, %578 : vector<16x16xf32>
      %581 = arith.divf %579, %580 : vector<16x16xf32>
      %c0_135 = arith.constant 0 : index
      %c0_136 = arith.constant 0 : index
      %c0_137 = arith.constant 0 : index
      %582 = vector.load %arg4[%c0_135, %c0_136, %c0_137] : memref<1x16x16xf32, #tpu.memory_space<vmem>>, vector<1x16x16xf32>
      %583 = vector.shape_cast %582 : vector<1x16x16xf32> to vector<16x16xf32>
      %584 = vector.shape_cast %581 : vector<16x16xf32> to vector<1x16x16xf32>
      tpu.vector_store %arg4[%c0_135, %c0_136, %c0_137], %584 {strides = array<i32>} : memref<1x16x16xf32, #tpu.memory_space<vmem>>, vector<1x16x16xf32>,
    } else {
    }
    return
  }
  func.func @transform_0(%arg0: i32, %arg1: i32) -> i32 {
    %c0_i32 = arith.constant 0 : i32
    %c0_i32_0 = arith.constant 0 : i32
    return %c0_i32 : i32
  }
  func.func @transform_1(%arg0: i32, %arg1: i32) -> (i32, i32, i32) {
    %c0_i32 = arith.constant 0 : i32
    %c0_i32_0 = arith.constant 0 : i32
    return %arg0, %arg1, %c0_i32 : i32, i32, i32
  }
  func.func @transform_2(%arg0: i32, %arg1: i32) -> (i32, i32, i32) {
    %c0_i32 = arith.constant 0 : i32
    %c0_i32_0 = arith.constant 0 : i32
    %c0_i32_1 = arith.constant 0 : i32
    return %arg0, %c0_i32, %c0_i32_0 : i32, i32, i32
  }
}

</mosaic_0001>

<llo_original>
// kernel: spatial_attention.1
$region0: #{spatial_attention.1}
  #allocation0 [shape = 'u32[]', space=smem, size = 0x4, offset = 0x4, fixed_abs, tag = 'smem constant byte address 0x4 - core index']
  #allocation1 [shape = 'u32[144,128]{1,0:T(1,128)}', space=vmem, size = 0x12000, scoped, tag = 'internal scratch']
  #allocation2 [shape = 'f32[4,256]{1,0:T(4,128)}', space=vmem, size = 0x1000, scoped, tag = 'scratch operand']
  #allocation3 [shape = 'f32[4,256]{1,0:T(4,128)}', space=vmem, size = 0x1000, scoped, tag = 'scratch operand']
  #allocation4 [shape = 'f32[2,24,128]{2,1,0:T(8,128)}', space=vmem, size = 0x6000, scoped, tag = 'scratch operand']
  %s0 = inlined_call_operand.vmem [shape: f32[98], index: 0, kind: input, shape index: {}]
  %s1 = inlined_call_operand.vmem [shape: f32[2,4,256], index: 1, kind: input, shape index: {}]
  %s2 = inlined_call_operand.hbm [shape: f32[2,16,16], index: 2, kind: output, shape index: {}]
  %s3 = sld [smem:[#allocation0]]
  $region53: #{spatial_attention.1} parent=0
    _
  %s5 = ssub.s32 1, %s3
  %s6 = scalar_select 0, %s5, %s3
  $region1: #{spatial_attention.1} parent=0
    #allocation5 [shape = 'u8[512]{0}', space=smem, size = 0x200, scoped, tag = 'input window, operand 0, single buffered']
    #allocation6 [shape = 's32[2]{0}', space=sflag, size = 0x8, scoped, tag = 'scoped memory for spatial_attention.1']
    #allocation7 [shape = 's32[2]{0}', space=sflag, size = 0x8, scoped, tag = 'scoped memory for spatial_attention.1']
    #allocation8 [shape = 'u8[16384]{0}', space=vmem, size = 0x4000, scoped, tag = 'output window, operand 0']
    %7 = vsyncpa [#allocation7], 0
    %8 = vsyncpa [#allocation6], 0
    %s9 = scalar_lea.sflag [#allocation6], 1
    %10 = vsyncpa %s9, 0
    loop: start=0, step=1, limit=4
    $region2: #{spatial_attention.1} parent=1 // loop_pre_header
      _
    $region3: #{spatial_attention.1} parent=1 // loop_header
      %s12 = sphi 0, %s16
      %p13 = scmp.ge.s32.totalorder %s12, 4
      %s19 = sphi 0, %s31
      %s20 = sphi 0, %s27
      %s21 = sphi 0, %s19
      %s22 = sphi 0, %s20
      %s23 = sphi 0, %s21
      %s24 = sphi 0, %s22
      %s32 = sphi 0, %s32
      %s34 = sphi 0, %s32
      %s35 = sphi 0, %s34
      %s49 = sphi 0, %s35
      %s57 = sphi 0, %s59
      %s60 = sphi 0, %s57
      %s61 = sphi 0, %s60
      %s77 = sphi 0, %s61
      %s83 = sphi 0, %s85
      %s86 = sphi 0, %s83
      %s87 = sphi 0, %s86
      %s103 = sphi 0, %s87
    $region4: #{spatial_attention.1} parent=1 // loop_header_branch
      %15 = sbr.rel (%p13) target = $region8
    $region5: #{spatial_attention.1} parent=1 // loop_body
      %s17 = ssub.s32 %s12, 1
      %s18 = ssub.s32 %s12, 2
      %s25 = sadd.s32 1, %s20
      %p26 = scmp.ge.s32.totalorder %s25, 1
      %s27 = scalar_select %p26, 0, %s25
      %s28 = sadd.s32 1, %s19
      %s29 = scalar_select %p26, %s28, %s19
      %p30 = scmp.ge.s32.totalorder %s29, 2
      %s31 = scalar_select %p30, 0, %s29
      %s33 = sadd.s32 %s32, 1
      %p36 = scmp.eq.s32.totalorder %s12, 1
      %p37 = scmp.ne.s32.totalorder %s32, %s34
      %p38 = scmp.eq.s32.totalorder %s12, 0
      %p39 = por %p37, %p38
      %p40 = scmp.ne.s32.totalorder %s32, %s34
      %p41 = scmp.eq.s32.totalorder %s17, 1
      %p42 = por %p40, %p41
      %p43 = scmp.ne.s32.totalorder %s34, %s35
      %p44 = scmp.eq.s32.totalorder %s17, 0
      %p45 = por %p43, %p44
      %p46 = scmp.ne.s32.totalorder %s34, %s35
      %p47 = scmp.eq.s32.totalorder %s18, 1
      %p48 = por %p46, %p47
      %p50 = scmp.ne.s32.totalorder %s35, %s49
      %p51 = scmp.eq.s32.totalorder %s18, 0
      %p52 = por %p50, %p51
      %s53 = ssub.s32 %s19, %s31
      %s54 = ssub.s32 %s20, %s27
      %s55 = sor.u32 %s53, %s54
      %p56 = scmp.eq.s32.totalorder %s55, 0
      %s58 = sadd.s32 %s57, 1
      %s59 = scalar_select %p56, %s57, %s58
      %p62 = pneg %p56
      %p63 = scmp.eq.s32.totalorder %s12, 1
      %p64 = por %p62, %p63
      %p65 = scmp.ne.s32.totalorder %s57, %s60
      %p66 = scmp.eq.s32.totalorder %s12, 0
      %p67 = por %p65, %p66
      %p68 = scmp.ne.s32.totalorder %s57, %s60
      %p69 = scmp.eq.s32.totalorder %s17, 1
      %p70 = por %p68, %p69
      %p71 = scmp.ne.s32.totalorder %s60, %s61
      %p72 = scmp.eq.s32.totalorder %s17, 0
      %p73 = por %p71, %p72
      %p74 = scmp.ne.s32.totalorder %s60, %s61
      %p75 = scmp.eq.s32.totalorder %s18, 1
      %p76 = por %p74, %p75
      %p78 = scmp.ne.s32.totalorder %s61, %s77
      %p79 = scmp.eq.s32.totalorder %s18, 0
      %p80 = por %p78, %p79
      %s81 = ssub.s32 %s19, %s31
      %p82 = scmp.eq.s32.totalorder %s81, 0
      %s84 = sadd.s32 %s83, 1
      %s85 = scalar_select %p82, %s83, %s84
      %p88 = pneg %p82
      %p89 = scmp.eq.s32.totalorder %s12, 1
      %p90 = por %p88, %p89
      %p91 = scmp.ne.s32.totalorder %s83, %s86
      %p92 = scmp.eq.s32.totalorder %s12, 0
      %p93 = por %p91, %p92
      %p94 = scmp.ne.s32.totalorder %s83, %s86
      %p95 = scmp.eq.s32.totalorder %s17, 1
      %p96 = por %p94, %p95
      %p97 = scmp.ne.s32.totalorder %s86, %s87
      %p98 = scmp.eq.s32.totalorder %s17, 0
      %p99 = por %p97, %p98
      %p100 = scmp.ne.s32.totalorder %s86, %s87
      %p101 = scmp.eq.s32.totalorder %s18, 1
      %p102 = por %p100, %p101
      %p104 = scmp.ne.s32.totalorder %s87, %s103
      %p105 = scmp.eq.s32.totalorder %s18, 0
      %p106 = por %p104, %p105
      %p107 = scmp.le.s32.totalorder 1, %s12
      %p108 = scmp.lt.s32.totalorder %s12, 3
      %p109 = pnand %p107, %p108
      %p110 = pneg %p109
      // Predicated region
      $region9: #{spatial_attention.1} parent=5 // pred_check
        _
      $region10: #{spatial_attention.1} parent=5 // pred_check_branch
        %112 = sbr.rel (%p109) target = $region12
      $region11: #{spatial_attention.1} parent=5 // pred_region
        %s113 = ssub.s32 %s12, 1
        // Predicated region
        $region13: #{spatial_attention.1} parent=11 // pred_check
          %p114 = pneg %p45
        $region14: #{spatial_attention.1} parent=11 // pred_check_branch
          %116 = sbr.rel (%p114) target = $region16
        $region15: #{spatial_attention.1} parent=11 // pred_region
          %s118 = ssub.s32 16, 16
          %119 = vsyncadd [#allocation7], %s118
          %s121 = sshll.u32 %s0, 4
          %s122 = int_to_ptr.vmem [resolvable:$true] %s121
          %124 = dma.vmem_to_smem %s122, 16, [#allocation5], [#allocation7]
        $region16: #{spatial_attention.1} parent=11 // pred_fallthru
          _
      $region12: #{spatial_attention.1} parent=5 // pred_fallthru
        _
      %p125 = scmp.lt.s32.totalorder %s12, 2
      // Predicated region
      $region17: #{spatial_attention.1} parent=5 // pred_check
        %p126 = pneg %p125
      $region18: #{spatial_attention.1} parent=5 // pred_check_branch
        %128 = sbr.rel (%p126) target = $region20
      $region19: #{spatial_attention.1} parent=5 // pred_region
        // Predicated region
        $region21: #{spatial_attention.1} parent=19 // pred_check
          %p129 = pneg %p67
        $region22: #{spatial_attention.1} parent=19 // pred_check_branch
          %131 = sbr.rel (%p129) target = $region24
        $region23: #{spatial_attention.1} parent=19 // pred_region
          %p132 = scmp.lt.s32.totalorder %s19, 1
          %s133 = scalar_select %p132, %s19, 1
          %p134 = scmp.lt.s32.totalorder %s20, 0
          %s135 = scalar_select %p134, %s20, 0
          %s136 = smul.addr %s135, 2
          %s137 = smul.addr %s133, 2
          %s138 = sadd.s32 %s136, %s137
          %s139 = smul.addr %s138, 4
          %s140 = scalar_lea.vmem %s1, %s139
        $region24: #{spatial_attention.1} parent=19 // pred_fallthru
          _
      $region20: #{spatial_attention.1} parent=5 // pred_fallthru
        _
      %p141 = scmp.le.s32.totalorder 1, %s12
      %p142 = scmp.lt.s32.totalorder %s12, 3
      %p143 = pnand %p141, %p142
      %p144 = pneg %p143
      // Predicated region
      $region25: #{spatial_attention.1} parent=5 // pred_check
        _
      $region26: #{spatial_attention.1} parent=5 // pred_check_branch
        %146 = sbr.rel (%p143) target = $region28
      $region27: #{spatial_attention.1} parent=5 // pred_region
        %s147 = ssub.s32 %s12, 1
        // Predicated region
        $region29: #{spatial_attention.1} parent=27 // pred_check
          %p148 = pneg %p45
        $region30: #{spatial_attention.1} parent=27 // pred_check_branch
          %150 = sbr.rel (%p148) target = $region32
        $region31: #{spatial_attention.1} parent=27 // pred_region
          %151 = dma.done [#allocation7], 16
        $region32: #{spatial_attention.1} parent=27 // pred_fallthru
          _
        %152 = sfence
        %p153 = pneg %p45
        %p154 = pneg %p42
        %p155 = scmp.lt.s32.totalorder %s21, 1
        %s156 = scalar_select %p155, %s21, 1
        %p157 = scmp.lt.s32.totalorder %s22, 0
        %s158 = scalar_select %p157, %s22, 0
        %s159 = smul.addr %s158, 2
        %s160 = smul.addr %s156, 2
        %s161 = sadd.s32 %s159, %s160
        %s162 = smul.addr %s161, 4
        %s163 = scalar_lea.vmem %s1, %s162
        %p164 = pneg %p73
        %p165 = pneg %p70
        %p166 = pneg %p99
        %p167 = pneg %p96
        %s168 = sand.u32 %s86, 1
        %s169 = scalar_lea.sflag [#allocation6], %s168
        %s170 = sand.u32 %s86, 1
        %s171 = smul.addr %s170, 16
        %s172 = scalar_lea.vmem [#allocation8], %s171
        %p173 = scmp.lt.s32.totalorder %s21, 1
        %s174 = scalar_select %p173, %s21, 1
        %p175 = scmp.lt.s32.totalorder %s22, 0
        %s176 = scalar_select %p175, %s22, 0
        %s177 = smul.addr %s176, 2
        %s178 = smul.addr %s174, 2
        %s179 = sadd.s32 %s177, %s178
        %s180 = smul.addr %s179, 4
        %s181 = scalar_lea.vmem %s1, %s180
        %p182 = scmp.eq.s32.totalorder %s22, 0
        // Predicated region
        $region33: #{spatial_attention.1} parent=27 // pred_check
          %p183 = pneg %p182
        $region34: #{spatial_attention.1} parent=27 // pred_check_branch
          %185 = sbr.rel (%p183) target = $region36
        $region35: #{spatial_attention.1} parent=27 // pred_region
          %186 = vst [vmem:[#allocation2] sm:$0xff] 0.0
          %187 = vst [vmem:[#allocation3] sm:$0xff] -inf
        $region36: #{spatial_attention.1} parent=27 // pred_fallthru
          _
        %v188 = vld [vmem:[#allocation2] sm:$0xff]
        %v189 = vld [vmem:[#allocation3] sm:$0xff]
        %v190 = vld [vmem:[%s181] sm:$0xff]
        %v191 = vadd.f32 %v188, %v190
        %v192 = vmax.f32 %v189, %v190
        %193 = vst [vmem:[#allocation2] sm:$0xff] %v191
        %194 = vst [vmem:[#allocation3] sm:$0xff] %v192
        // Predicated region
        $region37: #{spatial_attention.1} parent=27 // pred_check
          %p195 = pneg %p182
        $region38: #{spatial_attention.1} parent=27 // pred_check_branch
          %197 = sbr.rel (%p195) target = $region40
        $region39: #{spatial_attention.1} parent=27 // pred_region
          %v198 = vld [vmem:[#allocation2] sm:$0xff]
          %v200 = vcombine.high %v198, %v198
          %vm202 = vcmask 1043456
          %v203 = vsel %vm202, %v198, 0.0
          %v204 = vrot.slane %v203, 4
          %v205 = vadd.f32 %v203, %v204
          %v206 = vrot.slane %v205, 2
          %v207 = vadd.f32 %v205, %v206
          %v208 = vrot.slane %v207, 1
          %v209 = vadd.f32 %v207, %v208
          %v210 = vsel %vm202, %v200, 0.0
          %v211 = vrot.slane %v210, 4
          %v212 = vadd.f32 %v210, %v211
          %v213 = vrot.slane %v212, 2
          %v214 = vadd.f32 %v212, %v213
          %v215 = vrot.slane %v214, 1
          %v216 = vadd.f32 %v214, %v215
          %v217 = vmul.f32 %v209, 0.25
          %v218 = vmul.f32 %v216, 0.25
          %v219 = vld [vmem:[#allocation3] sm:$0xff]
          %v221 = vcombine.high %v219, %v219
          %v223 = vsel %vm202, %v219, -inf
          %v224 = vrot.slane %v223, 4
          %v225 = vmax.f32 %v223, %v224
          %v226 = vrot.slane %v225, 2
          %v227 = vmax.f32 %v225, %v226
          %v228 = vrot.slane %v227, 1
          %v229 = vmax.f32 %v227, %v228
          %v230 = vsel %vm202, %v221, -inf
          %v231 = vrot.slane %v230, 4
          %v232 = vmax.f32 %v230, %v231
          %v233 = vrot.slane %v232, 2
          %v234 = vmax.f32 %v232, %v233
          %v235 = vrot.slane %v234, 1
          %v236 = vmax.f32 %v234, %v235
          %237 = vst [vmem:[#allocation4] sm:$0xff] 0.0
          %238 = vst [vmem:[#allocation4 + $0x8] sm:$0xff] 0.0
          %239 = vst [vmem:[#allocation4 + $0x10] sm:$0xff] 0.0
          %240 = vst [vmem:[#allocation4 + $0x18] sm:$0xff] 0.0
          %241 = vst [vmem:[#allocation4 + $0x20] sm:$0xff] 0.0
          %242 = vst [vmem:[#allocation4 + $0x28] sm:$0xff] 0.0
          %vm243 = vcmask 122880
          %244 = vst.msk [vmem:[#allocation4 + $0x3] sm:$0x1] %vm243, %v217
          %s245 = scalar_lea.vmem [#allocation4], 24
          %246 = vst.msk [vmem:[%s245 + $0x3] sm:$0x1] %vm243, %v229
          %248 = vrot.lane.b32.xlu0 %v217, 112
          %v249 = vpop.permute.xlu0 %248
          %251 = vst.msk [vmem:[#allocation4 + $0x4] sm:$0x1] %vm243, %v249
          %253 = vrot.lane.b32.xlu0 %v229, 112
          %v254 = vpop.permute.xlu0 %253
          %256 = vst.msk [vmem:[%s245 + $0x4] sm:$0x1] %vm243, %v254
          %257 = vrot.lane.b32.xlu0 %v217, 96
          %v258 = vpop.permute.xlu0 %257
          %260 = vst.msk [vmem:[#allocation4 + $0x5] sm:$0x1] %vm243, %v258
          %261 = vrot.lane.b32.xlu0 %v229, 96
          %v262 = vpop.permute.xlu0 %261
          %264 = vst.msk [vmem:[%s245 + $0x5] sm:$0x1] %vm243, %v262
          %265 = vrot.lane.b32.xlu0 %v217, 80
          %v266 = vpop.permute.xlu0 %265
          %268 = vst.msk [vmem:[#allocation4 + $0x6] sm:$0x1] %vm243, %v266
          %269 = vrot.lane.b32.xlu0 %v229, 80
          %v270 = vpop.permute.xlu0 %269
          %272 = vst.msk [vmem:[%s245 + $0x6] sm:$0x1] %vm243, %v270
          %273 = vrot.lane.b32.xlu0 %v217, 64
          %v274 = vpop.permute.xlu0 %273
          %276 = vst.msk [vmem:[#allocation4 + $0x7] sm:$0x1] %vm243, %v274
          %277 = vrot.lane.b32.xlu0 %v229, 64
          %v278 = vpop.permute.xlu0 %277
          %280 = vst.msk [vmem:[%s245 + $0x7] sm:$0x1] %vm243, %v278
          %281 = vrot.lane.b32.xlu0 %v217, 48
          %v282 = vpop.permute.xlu0 %281
          %284 = vst.msk [vmem:[#allocation4 + $0x8] sm:$0x1] %vm243, %v282
          %285 = vrot.lane.b32.xlu0 %v229, 48
          %v286 = vpop.permute.xlu0 %285
          %288 = vst.msk [vmem:[%s245 + $0x8] sm:$0x1] %vm243, %v286
          %289 = vrot.lane.b32.xlu0 %v217, 32
          %v290 = vpop.permute.xlu0 %289
          %292 = vst.msk [vmem:[#allocation4 + $0x9] sm:$0x1] %vm243, %v290
          %293 = vrot.lane.b32.xlu0 %v229, 32
          %v294 = vpop.permute.xlu0 %293
          %296 = vst.msk [vmem:[%s245 + $0x9] sm:$0x1] %vm243, %v294
          %297 = vrot.lane.b32.xlu0 %v217, 16
          %v298 = vpop.permute.xlu0 %297
          %300 = vst.msk [vmem:[#allocation4 + $0xa] sm:$0x1] %vm243, %v298
          %301 = vrot.lane.b32.xlu0 %v229, 16
          %v302 = vpop.permute.xlu0 %301
          %304 = vst.msk [vmem:[%s245 + $0xa] sm:$0x1] %vm243, %v302
          %305 = vst.msk [vmem:[#allocation4 + $0xb] sm:$0x1] %vm243, %v218
          %306 = vst.msk [vmem:[%s245 + $0xb] sm:$0x1] %vm243, %v236
          %308 = vrot.lane.b32.xlu0 %v218, 112
          %v309 = vpop.permute.xlu0 %308
          %311 = vst.msk [vmem:[#allocation4 + $0xc] sm:$0x1] %vm243, %v309
          %313 = vrot.lane.b32.xlu0 %v236, 112
          %v314 = vpop.permute.xlu0 %313
          %316 = vst.msk [vmem:[%s245 + $0xc] sm:$0x1] %vm243, %v314
          %317 = vrot.lane.b32.xlu0 %v218, 96
          %v318 = vpop.permute.xlu0 %317
          %320 = vst.msk [vmem:[#allocation4 + $0xd] sm:$0x1] %vm243, %v318
          %321 = vrot.lane.b32.xlu0 %v236, 96
          %v322 = vpop.permute.xlu0 %321
          %324 = vst.msk [vmem:[%s245 + $0xd] sm:$0x1] %vm243, %v322
          %325 = vrot.lane.b32.xlu0 %v218, 80
          %v326 = vpop.permute.xlu0 %325
          %328 = vst.msk [vmem:[#allocation4 + $0xe] sm:$0x1] %vm243, %v326
          %329 = vrot.lane.b32.xlu0 %v236, 80
          %v330 = vpop.permute.xlu0 %329
          %332 = vst.msk [vmem:[%s245 + $0xe] sm:$0x1] %vm243, %v330
          %333 = vrot.lane.b32.xlu0 %v218, 64
          %v334 = vpop.permute.xlu0 %333
          %336 = vst.msk [vmem:[#allocation4 + $0xf] sm:$0x1] %vm243, %v334
          %337 = vrot.lane.b32.xlu0 %v236, 64
          %v338 = vpop.permute.xlu0 %337
          %340 = vst.msk [vmem:[%s245 + $0xf] sm:$0x1] %vm243, %v338
          %341 = vrot.lane.b32.xlu0 %v218, 48
          %v342 = vpop.permute.xlu0 %341
          %344 = vst.msk [vmem:[#allocation4 + $0x10] sm:$0x1] %vm243, %v342
          %345 = vrot.lane.b32.xlu0 %v236, 48
          %v346 = vpop.permute.xlu0 %345
          %348 = vst.msk [vmem:[%s245 + $0x10] sm:$0x1] %vm243, %v346
          %349 = vrot.lane.b32.xlu0 %v218, 32
          %v350 = vpop.permute.xlu0 %349
          %352 = vst.msk [vmem:[#allocation4 + $0x11] sm:$0x1] %vm243, %v350
          %353 = vrot.lane.b32.xlu0 %v236, 32
          %v354 = vpop.permute.xlu0 %353
          %356 = vst.msk [vmem:[%s245 + $0x11] sm:$0x1] %vm243, %v354
          %357 = vrot.lane.b32.xlu0 %v218, 16
          %v358 = vpop.permute.xlu0 %357
          %360 = vst.msk [vmem:[#allocation4 + $0x12] sm:$0x1] %vm243, %v358
          %361 = vrot.lane.b32.xlu0 %v236, 16
          %v362 = vpop.permute.xlu0 %361
          %364 = vst.msk [vmem:[%s245 + $0x12] sm:$0x1] %vm243, %v362
          %v365 = vld [vmem:[#allocation4] sm:$0xff]
          %v366 = vld [vmem:[#allocation4 + $0x8] sm:$0xff]
          %v367 = vld [vmem:[#allocation4 + $0x10] sm:$0xff]
          %368 = vrot.lane.b32.xlu0 %v365, 3
          %v369 = vpop.permute.xlu0 %368
          %370 = vrot.lane.b32.xlu0 %v366, 3
          %v371 = vpop.permute.xlu0 %370
          %372 = vrot.lane.b32.xlu0 %v367, 3
          %v373 = vpop.permute.xlu0 %372
          %374 = vrot.lane.b32.xlu0 %v365, 2
          %v375 = vpop.permute.xlu0 %374
          %376 = vrot.lane.b32.xlu0 %v366, 2
          %v377 = vpop.permute.xlu0 %376
          %378 = vrot.lane.b32.xlu0 %v367, 2
          %v379 = vpop.permute.xlu0 %378
          %380 = vrot.lane.b32.xlu0 %v365, 1
          %v381 = vpop.permute.xlu0 %380
          %382 = vrot.lane.b32.xlu0 %v366, 1
          %v383 = vpop.permute.xlu0 %382
          %384 = vrot.lane.b32.xlu0 %v367, 1
          %v385 = vpop.permute.xlu0 %384
          %386 = vrot.lane.b32.xlu0 %v365, 127
          %v387 = vpop.permute.xlu0 %386
          %388 = vrot.lane.b32.xlu0 %v366, 127
          %v389 = vpop.permute.xlu0 %388
          %390 = vrot.lane.b32.xlu0 %v367, 127
          %v391 = vpop.permute.xlu0 %390
          %392 = vrot.lane.b32.xlu0 %v365, 126
          %v393 = vpop.permute.xlu0 %392
          %394 = vrot.lane.b32.xlu0 %v366, 126
          %v395 = vpop.permute.xlu0 %394
          %396 = vrot.lane.b32.xlu0 %v367, 126
          %v397 = vpop.permute.xlu0 %396
          %398 = vrot.lane.b32.xlu0 %v365, 125
          %v399 = vpop.permute.xlu0 %398
          %400 = vrot.lane.b32.xlu0 %v366, 125
          %v401 = vpop.permute.xlu0 %400
          %402 = vrot.lane.b32.xlu0 %v367, 125
          %v403 = vpop.permute.xlu0 %402
          %s404 = sld [smem:[#allocation5]]
          %v405 = vstv %s404
          %v406 = vmul.f32 %v369, %v405
          %v407 = vmul.f32 %v371, %v405
          %s408 = sld [smem:[#allocation5 + $0x1]]
          %v409 = vstv %s408
          %v410 = vmul.f32 %v375, %v409
          %v411 = vmul.f32 %v377, %v409
          %v412 = vadd.f32 %v406, %v410
          %v413 = vadd.f32 %v407, %v411
          %s414 = sld [smem:[#allocation5 + $0x2]]
          %v415 = vstv %s414
          %v416 = vmul.f32 %v381, %v415
          %v417 = vmul.f32 %v383, %v415
          %v418 = vadd.f32 %v412, %v416
          %v419 = vadd.f32 %v413, %v417
          %s420 = sld [smem:[#allocation5 + $0x3]]
          %v421 = vstv %s420
          %v422 = vmul.f32 %v365, %v421
          %v423 = vmul.f32 %v366, %v421
          %v424 = vadd.f32 %v418, %v422
          %v425 = vadd.f32 %v419, %v423
          %s426 = sld [smem:[#allocation5 + $0x4]]
          %v427 = vstv %s426
          %v428 = vmul.f32 %v387, %v427
          %v429 = vmul.f32 %v389, %v427
          %v430 = vadd.f32 %v424, %v428
          %v431 = vadd.f32 %v425, %v429
          %s432 = sld [smem:[#allocation5 + $0x5]]
          %v433 = vstv %s432
          %v434 = vmul.f32 %v393, %v433
          %v435 = vmul.f32 %v395, %v433
          %v436 = vadd.f32 %v430, %v434
          %v437 = vadd.f32 %v431, %v435
          %s438 = sld [smem:[#allocation5 + $0x6]]
          %v439 = vstv %s438
          %v440 = vmul.f32 %v399, %v439
          %v441 = vmul.f32 %v401, %v439
          %v442 = vadd.f32 %v436, %v440
          %v443 = vadd.f32 %v437, %v441
          %v444 = vadd.f32 %v442, 0.0
          %v445 = vadd.f32 %v443, 0.0
          %s446 = sld [smem:[#allocation5 + $0x7]]
          %v447 = vstv %s446
          %v448 = vmul.f32 %v369, %v447
          %v449 = vmul.f32 %v371, %v447
          %v450 = vmul.f32 %v373, %v447
          %s451 = sld [smem:[#allocation5 + $0x8]]
          %v452 = vstv %s451
          %v453 = vmul.f32 %v375, %v452
          %v454 = vmul.f32 %v377, %v452
          %v455 = vmul.f32 %v379, %v452
          %v456 = vadd.f32 %v448, %v453
          %v457 = vadd.f32 %v449, %v454
          %v458 = vadd.f32 %v450, %v455
          %s459 = sld [smem:[#allocation5 + $0x9]]
          %v460 = vstv %s459
          %v461 = vmul.f32 %v381, %v460
          %v462 = vmul.f32 %v383, %v460
          %v463 = vmul.f32 %v385, %v460
          %v464 = vadd.f32 %v456, %v461
          %v465 = vadd.f32 %v457, %v462
          %v466 = vadd.f32 %v458, %v463
          %s467 = sld [smem:[#allocation5 + $0xa]]
          %v468 = vstv %s467
          %v469 = vmul.f32 %v365, %v468
          %v470 = vmul.f32 %v366, %v468
          %v471 = vmul.f32 %v367, %v468
          %v472 = vadd.f32 %v464, %v469
          %v473 = vadd.f32 %v465, %v470
          %v474 = vadd.f32 %v466, %v471
          %s475 = sld [smem:[#allocation5 + $0xb]]
          %v476 = vstv %s475
          %v477 = vmul.f32 %v387, %v476
          %v478 = vmul.f32 %v389, %v476
          %v479 = vmul.f32 %v391, %v476
          %v480 = vadd.f32 %v472, %v477
          %v481 = vadd.f32 %v473, %v478
          %v482 = vadd.f32 %v474, %v479
          %s483 = sld [smem:[#allocation5 + $0xc]]
          %v484 = vstv %s483
          %v485 = vmul.f32 %v393, %v484
          %v486 = vmul.f32 %v395, %v484
          %v487 = vmul.f32 %v397, %v484
          %v488 = vadd.f32 %v480, %v485
          %v489 = vadd.f32 %v481, %v486
          %v490 = vadd.f32 %v482, %v487
          %s491 = sld [smem:[#allocation5 + $0xd]]
          %v492 = vstv %s491
          %v493 = vmul.f32 %v399, %v492
          %v494 = vmul.f32 %v401, %v492
          %v495 = vmul.f32 %v403, %v492
          %v496 = vadd.f32 %v488, %v493
          %v497 = vadd.f32 %v489, %v494
          %v498 = vadd.f32 %v490, %v495
          %v499 = vadd.f32 %v496, 0.0
          %v500 = vadd.f32 %v497, 0.0
          %v501 = vadd.f32 %v498, 0.0
          %s502 = sld [smem:[#allocation5 + $0xe]]
          %v503 = vstv %s502
          %v504 = vmul.f32 %v369, %v503
          %v505 = vmul.f32 %v371, %v503
          %v506 = vmul.f32 %v373, %v503
          %s507 = sld [smem:[#allocation5 + $0xf]]
          %v508 = vstv %s507
          %v509 = vmul.f32 %v375, %v508
          %v510 = vmul.f32 %v377, %v508
          %v511 = vmul.f32 %v379, %v508
          %v512 = vadd.f32 %v504, %v509
          %v513 = vadd.f32 %v505, %v510
          %v514 = vadd.f32 %v506, %v511
          %s515 = sld [smem:[#allocation5 + $0x10]]
          %v516 = vstv %s515
          %v517 = vmul.f32 %v381, %v516
          %v518 = vmul.f32 %v383, %v516
          %v519 = vmul.f32 %v385, %v516
          %v520 = vadd.f32 %v512, %v517
          %v521 = vadd.f32 %v513, %v518
          %v522 = vadd.f32 %v514, %v519
          %s523 = sld [smem:[#allocation5 + $0x11]]
          %v524 = vstv %s523
          %v525 = vmul.f32 %v365, %v524
          %v526 = vmul.f32 %v366, %v524
          %v527 = vmul.f32 %v367, %v524
          %v528 = vadd.f32 %v520, %v525
          %v529 = vadd.f32 %v521, %v526
          %v530 = vadd.f32 %v522, %v527
          %s531 = sld [smem:[#allocation5 + $0x12]]
          %v532 = vstv %s531
          %v533 = vmul.f32 %v387, %v532
          %v534 = vmul.f32 %v389, %v532
          %v535 = vmul.f32 %v391, %v532
          %v536 = vadd.f32 %v528, %v533
          %v537 = vadd.f32 %v529, %v534
          %v538 = vadd.f32 %v530, %v535
          %s539 = sld [smem:[#allocation5 + $0x13]]
          %v540 = vstv %s539
          %v541 = vmul.f32 %v393, %v540
          %v542 = vmul.f32 %v395, %v540
          %v543 = vmul.f32 %v397, %v540
          %v544 = vadd.f32 %v536, %v541
          %v545 = vadd.f32 %v537, %v542
          %v546 = vadd.f32 %v538, %v543
          %s547 = sld [smem:[#allocation5 + $0x14]]
          %v548 = vstv %s547
          %v549 = vmul.f32 %v399, %v548
          %v550 = vmul.f32 %v401, %v548
          %v551 = vmul.f32 %v403, %v548
          %v552 = vadd.f32 %v544, %v549
          %v553 = vadd.f32 %v545, %v550
          %v554 = vadd.f32 %v546, %v551
          %vm558 = vcmask 1045504
          %v559 = vrot.slane %v552, 2
          %v560 = vrot.slane %v553, 2
          %v561 = vsel %vm558, %v559, %v560
          %v562 = vrot.slane %v554, 2
          %v563 = vsel %vm558, %v560, %v562
          %v566 = vadd.f32 %v444, %v561
          %v567 = vadd.f32 %v445, %v563
          %s568 = sld [smem:[#allocation5 + $0x15]]
          %v569 = vstv %s568
          %v570 = vmul.f32 %v369, %v569
          %v571 = vmul.f32 %v371, %v569
          %v572 = vmul.f32 %v373, %v569
          %s573 = sld [smem:[#allocation5 + $0x16]]
          %v574 = vstv %s573
          %v575 = vmul.f32 %v375, %v574
          %v576 = vmul.f32 %v377, %v574
          %v577 = vmul.f32 %v379, %v574
          %v578 = vadd.f32 %v570, %v575
          %v579 = vadd.f32 %v571, %v576
          %v580 = vadd.f32 %v572, %v577
          %s581 = sld [smem:[#allocation5 + $0x17]]
          %v582 = vstv %s581
          %v583 = vmul.f32 %v381, %v582
          %v584 = vmul.f32 %v383, %v582
          %v585 = vmul.f32 %v385, %v582
          %v586 = vadd.f32 %v578, %v583
          %v587 = vadd.f32 %v579, %v584
          %v588 = vadd.f32 %v580, %v585
          %s589 = sld [smem:[#allocation5 + $0x18]]
          %v590 = vstv %s589
          %v591 = vmul.f32 %v365, %v590
          %v592 = vmul.f32 %v366, %v590
          %v593 = vmul.f32 %v367, %v590
          %v594 = vadd.f32 %v586, %v591
          %v595 = vadd.f32 %v587, %v592
          %v596 = vadd.f32 %v588, %v593
          %s597 = sld [smem:[#allocation5 + $0x19]]
          %v598 = vstv %s597
          %v599 = vmul.f32 %v387, %v598
          %v600 = vmul.f32 %v389, %v598
          %v601 = vmul.f32 %v391, %v598
          %v602 = vadd.f32 %v594, %v599
          %v603 = vadd.f32 %v595, %v600
          %v604 = vadd.f32 %v596, %v601
          %s605 = sld [smem:[#allocation5 + $0x1a]]
          %v606 = vstv %s605
          %v607 = vmul.f32 %v393, %v606
          %v608 = vmul.f32 %v395, %v606
          %v609 = vmul.f32 %v397, %v606
          %v610 = vadd.f32 %v602, %v607
          %v611 = vadd.f32 %v603, %v608
          %v612 = vadd.f32 %v604, %v609
          %s613 = sld [smem:[#allocation5 + $0x1b]]
          %v614 = vstv %s613
          %v615 = vmul.f32 %v399, %v614
          %v616 = vmul.f32 %v401, %v614
          %v617 = vmul.f32 %v403, %v614
          %v618 = vadd.f32 %v610, %v615
          %v619 = vadd.f32 %v611, %v616
          %v620 = vadd.f32 %v612, %v617
          %v624 = vrot.slane %v618, 2
          %v625 = vrot.slane %v619, 2
          %v626 = vsel %vm558, %v624, %v625
          %v627 = vrot.slane %v620, 2
          %v628 = vsel %vm558, %v625, %v627
          %v632 = vadd.f32 %v499, %v626
          %v633 = vadd.f32 %v500, %v628
          %v634 = vadd.f32 %v501, %v627
          %s635 = sld [smem:[#allocation5 + $0x1c]]
          %v636 = vstv %s635
          %v637 = vmul.f32 %v369, %v636
          %v638 = vmul.f32 %v371, %v636
          %v639 = vmul.f32 %v373, %v636
          %s640 = sld [smem:[#allocation5 + $0x1d]]
          %v641 = vstv %s640
          %v642 = vmul.f32 %v375, %v641
          %v643 = vmul.f32 %v377, %v641
          %v644 = vmul.f32 %v379, %v641
          %v645 = vadd.f32 %v637, %v642
          %v646 = vadd.f32 %v638, %v643
          %v647 = vadd.f32 %v639, %v644
          %s648 = sld [smem:[#allocation5 + $0x1e]]
          %v649 = vstv %s648
          %v650 = vmul.f32 %v381, %v649
          %v651 = vmul.f32 %v383, %v649
          %v652 = vmul.f32 %v385, %v649
          %v653 = vadd.f32 %v645, %v650
          %v654 = vadd.f32 %v646, %v651
          %v655 = vadd.f32 %v647, %v652
          %s656 = sld [smem:[#allocation5 + $0x1f]]
          %v657 = vstv %s656
          %v658 = vmul.f32 %v365, %v657
          %v659 = vmul.f32 %v366, %v657
          %v660 = vmul.f32 %v367, %v657
          %v661 = vadd.f32 %v653, %v658
          %v662 = vadd.f32 %v654, %v659
          %v663 = vadd.f32 %v655, %v660
          %s664 = sld [smem:[#allocation5 + $0x20]]
          %v665 = vstv %s664
          %v666 = vmul.f32 %v387, %v665
          %v667 = vmul.f32 %v389, %v665
          %v668 = vmul.f32 %v391, %v665
          %v669 = vadd.f32 %v661, %v666
          %v670 = vadd.f32 %v662, %v667
          %v671 = vadd.f32 %v663, %v668
          %s672 = sld [smem:[#allocation5 + $0x21]]
          %v673 = vstv %s672
          %v674 = vmul.f32 %v393, %v673
          %v675 = vmul.f32 %v395, %v673
          %v676 = vmul.f32 %v397, %v673
          %v677 = vadd.f32 %v669, %v674
          %v678 = vadd.f32 %v670, %v675
          %v679 = vadd.f32 %v671, %v676
          %s680 = sld [smem:[#allocation5 + $0x22]]
          %v681 = vstv %s680
          %v682 = vmul.f32 %v399, %v681
          %v683 = vmul.f32 %v401, %v681
          %v684 = vmul.f32 %v403, %v681
          %v685 = vadd.f32 %v677, %v682
          %v686 = vadd.f32 %v678, %v683
          %v687 = vadd.f32 %v679, %v684
          %v691 = vrot.slane %v685, 4
          %v692 = vrot.slane %v686, 4
          %v693 = vsel %vm202, %v691, %v692
          %v694 = vrot.slane %v687, 4
          %v695 = vsel %vm202, %v692, %v694
          %v698 = vadd.f32 %v566, %v693
          %v699 = vadd.f32 %v567, %v695
          %s700 = sld [smem:[#allocation5 + $0x23]]
          %v701 = vstv %s700
          %v702 = vmul.f32 %v369, %v701
          %v703 = vmul.f32 %v371, %v701
          %v704 = vmul.f32 %v373, %v701
          %s705 = sld [smem:[#allocation5 + $0x24]]
          %v706 = vstv %s705
          %v707 = vmul.f32 %v375, %v706
          %v708 = vmul.f32 %v377, %v706
          %v709 = vmul.f32 %v379, %v706
          %v710 = vadd.f32 %v702, %v707
          %v711 = vadd.f32 %v703, %v708
          %v712 = vadd.f32 %v704, %v709
          %s713 = sld [smem:[#allocation5 + $0x25]]
          %v714 = vstv %s713
          %v715 = vmul.f32 %v381, %v714
          %v716 = vmul.f32 %v383, %v714
          %v717 = vmul.f32 %v385, %v714
          %v718 = vadd.f32 %v710, %v715
          %v719 = vadd.f32 %v711, %v716
          %v720 = vadd.f32 %v712, %v717
          %s721 = sld [smem:[#allocation5 + $0x26]]
          %v722 = vstv %s721
          %v723 = vmul.f32 %v365, %v722
          %v724 = vmul.f32 %v366, %v722
          %v725 = vmul.f32 %v367, %v722
          %v726 = vadd.f32 %v718, %v723
          %v727 = vadd.f32 %v719, %v724
          %v728 = vadd.f32 %v720, %v725
          %s729 = sld [smem:[#allocation5 + $0x27]]
          %v730 = vstv %s729
          %v731 = vmul.f32 %v387, %v730
          %v732 = vmul.f32 %v389, %v730
          %v733 = vmul.f32 %v391, %v730
          %v734 = vadd.f32 %v726, %v731
          %v735 = vadd.f32 %v727, %v732
          %v736 = vadd.f32 %v728, %v733
          %s737 = sld [smem:[#allocation5 + $0x28]]
          %v738 = vstv %s737
          %v739 = vmul.f32 %v393, %v738
          %v740 = vmul.f32 %v395, %v738
          %v741 = vmul.f32 %v397, %v738
          %v742 = vadd.f32 %v734, %v739
          %v743 = vadd.f32 %v735, %v740
          %v744 = vadd.f32 %v736, %v741
          %s745 = sld [smem:[#allocation5 + $0x29]]
          %v746 = vstv %s745
          %v747 = vmul.f32 %v399, %v746
          %v748 = vmul.f32 %v401, %v746
          %v749 = vmul.f32 %v403, %v746
          %v750 = vadd.f32 %v742, %v747
          %v751 = vadd.f32 %v743, %v748
          %v752 = vadd.f32 %v744, %v749
          %v756 = vrot.slane %v750, 4
          %v757 = vrot.slane %v751, 4
          %v758 = vsel %vm202, %v756, %v757
          %v759 = vrot.slane %v752, 4
          %v760 = vsel %vm202, %v757, %v759
          %v764 = vadd.f32 %v632, %v758
          %v765 = vadd.f32 %v633, %v760
          %v766 = vadd.f32 %v634, %v759
          %s767 = sld [smem:[#allocation5 + $0x2a]]
          %v768 = vstv %s767
          %v769 = vmul.f32 %v369, %v768
          %v770 = vmul.f32 %v371, %v768
          %v771 = vmul.f32 %v373, %v768
          %s772 = sld [smem:[#allocation5 + $0x2b]]
          %v773 = vstv %s772
          %v774 = vmul.f32 %v375, %v773
          %v775 = vmul.f32 %v377, %v773
          %v776 = vmul.f32 %v379, %v773
          %v777 = vadd.f32 %v769, %v774
          %v778 = vadd.f32 %v770, %v775
          %v779 = vadd.f32 %v771, %v776
          %s780 = sld [smem:[#allocation5 + $0x2c]]
          %v781 = vstv %s780
          %v782 = vmul.f32 %v381, %v781
          %v783 = vmul.f32 %v383, %v781
          %v784 = vmul.f32 %v385, %v781
          %v785 = vadd.f32 %v777, %v782
          %v786 = vadd.f32 %v778, %v783
          %v787 = vadd.f32 %v779, %v784
          %s788 = sld [smem:[#allocation5 + $0x2d]]
          %v789 = vstv %s788
          %v790 = vmul.f32 %v365, %v789
          %v791 = vmul.f32 %v366, %v789
          %v792 = vmul.f32 %v367, %v789
          %v793 = vadd.f32 %v785, %v790
          %v794 = vadd.f32 %v786, %v791
          %v795 = vadd.f32 %v787, %v792
          %s796 = sld [smem:[#allocation5 + $0x2e]]
          %v797 = vstv %s796
          %v798 = vmul.f32 %v387, %v797
          %v799 = vmul.f32 %v389, %v797
          %v800 = vmul.f32 %v391, %v797
          %v801 = vadd.f32 %v793, %v798
          %v802 = vadd.f32 %v794, %v799
          %v803 = vadd.f32 %v795, %v800
          %s804 = sld [smem:[#allocation5 + $0x2f]]
          %v805 = vstv %s804
          %v806 = vmul.f32 %v393, %v805
          %v807 = vmul.f32 %v395, %v805
          %v808 = vmul.f32 %v397, %v805
          %v809 = vadd.f32 %v801, %v806
          %v810 = vadd.f32 %v802, %v807
          %v811 = vadd.f32 %v803, %v808
          %s812 = sld [smem:[#allocation5 + $0x30]]
          %v813 = vstv %s812
          %v814 = vmul.f32 %v399, %v813
          %v815 = vmul.f32 %v401, %v813
          %v816 = vmul.f32 %v403, %v813
          %v817 = vadd.f32 %v809, %v814
          %v818 = vadd.f32 %v810, %v815
          %v819 = vadd.f32 %v811, %v816
          %vm823 = vcmask 1041408
          %v824 = vrot.slane %v817, 6
          %v825 = vrot.slane %v818, 6
          %v826 = vsel %vm823, %v824, %v825
          %v827 = vrot.slane %v819, 6
          %v828 = vsel %vm823, %v825, %v827
          %v831 = vadd.f32 %v698, %v826
          %v832 = vadd.f32 %v699, %v828
          %v833 = vld [vmem:[%s245] sm:$0xff]
          %v834 = vld [vmem:[%s245 + $0x8] sm:$0xff]
          %v835 = vld [vmem:[%s245 + $0x10] sm:$0xff]
          %836 = vrot.lane.b32.xlu0 %v833, 3
          %v837 = vpop.permute.xlu0 %836
          %838 = vrot.lane.b32.xlu0 %v834, 3
          %v839 = vpop.permute.xlu0 %838
          %840 = vrot.lane.b32.xlu0 %v835, 3
          %v841 = vpop.permute.xlu0 %840
          %842 = vrot.lane.b32.xlu0 %v833, 2
          %v843 = vpop.permute.xlu0 %842
          %844 = vrot.lane.b32.xlu0 %v834, 2
          %v845 = vpop.permute.xlu0 %844
          %846 = vrot.lane.b32.xlu0 %v835, 2
          %v847 = vpop.permute.xlu0 %846
          %848 = vrot.lane.b32.xlu0 %v833, 1
          %v849 = vpop.permute.xlu0 %848
          %850 = vrot.lane.b32.xlu0 %v834, 1
          %v851 = vpop.permute.xlu0 %850
          %852 = vrot.lane.b32.xlu0 %v835, 1
          %v853 = vpop.permute.xlu0 %852
          %854 = vrot.lane.b32.xlu0 %v833, 127
          %v855 = vpop.permute.xlu0 %854
          %856 = vrot.lane.b32.xlu0 %v834, 127
          %v857 = vpop.permute.xlu0 %856
          %858 = vrot.lane.b32.xlu0 %v835, 127
          %v859 = vpop.permute.xlu0 %858
          %860 = vrot.lane.b32.xlu0 %v833, 126
          %v861 = vpop.permute.xlu0 %860
          %862 = vrot.lane.b32.xlu0 %v834, 126
          %v863 = vpop.permute.xlu0 %862
          %864 = vrot.lane.b32.xlu0 %v835, 126
          %v865 = vpop.permute.xlu0 %864
          %866 = vrot.lane.b32.xlu0 %v833, 125
          %v867 = vpop.permute.xlu0 %866
          %868 = vrot.lane.b32.xlu0 %v834, 125
          %v869 = vpop.permute.xlu0 %868
          %870 = vrot.lane.b32.xlu0 %v835, 125
          %v871 = vpop.permute.xlu0 %870
          %s872 = sld [smem:[#allocation5 + $0x31]]
          %v873 = vstv %s872
          %v874 = vmul.f32 %v837, %v873
          %v875 = vmul.f32 %v839, %v873
          %s876 = sld [smem:[#allocation5 + $0x32]]
          %v877 = vstv %s876
          %v878 = vmul.f32 %v843, %v877
          %v879 = vmul.f32 %v845, %v877
          %v880 = vadd.f32 %v874, %v878
          %v881 = vadd.f32 %v875, %v879
          %s882 = sld [smem:[#allocation5 + $0x33]]
          %v883 = vstv %s882
          %v884 = vmul.f32 %v849, %v883
          %v885 = vmul.f32 %v851, %v883
          %v886 = vadd.f32 %v880, %v884
          %v887 = vadd.f32 %v881, %v885
          %s888 = sld [smem:[#allocation5 + $0x34]]
          %v889 = vstv %s888
          %v890 = vmul.f32 %v833, %v889
          %v891 = vmul.f32 %v834, %v889
          %v892 = vadd.f32 %v886, %v890
          %v893 = vadd.f32 %v887, %v891
          %s894 = sld [smem:[#allocation5 + $0x35]]
          %v895 = vstv %s894
          %v896 = vmul.f32 %v855, %v895
          %v897 = vmul.f32 %v857, %v895
          %v898 = vadd.f32 %v892, %v896
          %v899 = vadd.f32 %v893, %v897
          %s900 = sld [smem:[#allocation5 + $0x36]]
          %v901 = vstv %s900
          %v902 = vmul.f32 %v861, %v901
          %v903 = vmul.f32 %v863, %v901
          %v904 = vadd.f32 %v898, %v902
          %v905 = vadd.f32 %v899, %v903
          %s906 = sld [smem:[#allocation5 + $0x37]]
          %v907 = vstv %s906
          %v908 = vmul.f32 %v867, %v907
          %v909 = vmul.f32 %v869, %v907
          %v910 = vadd.f32 %v904, %v908
          %v911 = vadd.f32 %v905, %v909
          %vm914 = vcmask 1040384
          %v915 = vrot.slane %v910, 7
          %v916 = vrot.slane %v911, 7
          %v917 = vsel %vm914, %v915, %v916
          %v921 = vadd.f32 %v764, %v915
          %v922 = vadd.f32 %v765, %v917
          %v923 = vadd.f32 %v766, %v916
          %s924 = sld [smem:[#allocation5 + $0x38]]
          %v925 = vstv %s924
          %v926 = vmul.f32 %v837, %v925
          %v927 = vmul.f32 %v839, %v925
          %v928 = vmul.f32 %v841, %v925
          %s929 = sld [smem:[#allocation5 + $0x39]]
          %v930 = vstv %s929
          %v931 = vmul.f32 %v843, %v930
          %v932 = vmul.f32 %v845, %v930
          %v933 = vmul.f32 %v847, %v930
          %v934 = vadd.f32 %v926, %v931
          %v935 = vadd.f32 %v927, %v932
          %v936 = vadd.f32 %v928, %v933
          %s937 = sld [smem:[#allocation5 + $0x3a]]
          %v938 = vstv %s937
          %v939 = vmul.f32 %v849, %v938
          %v940 = vmul.f32 %v851, %v938
          %v941 = vmul.f32 %v853, %v938
          %v942 = vadd.f32 %v934, %v939
          %v943 = vadd.f32 %v935, %v940
          %v944 = vadd.f32 %v936, %v941
          %s945 = sld [smem:[#allocation5 + $0x3b]]
          %v946 = vstv %s945
          %v947 = vmul.f32 %v833, %v946
          %v948 = vmul.f32 %v834, %v946
          %v949 = vmul.f32 %v835, %v946
          %v950 = vadd.f32 %v942, %v947
          %v951 = vadd.f32 %v943, %v948
          %v952 = vadd.f32 %v944, %v949
          %s953 = sld [smem:[#allocation5 + $0x3c]]
          %v954 = vstv %s953
          %v955 = vmul.f32 %v855, %v954
          %v956 = vmul.f32 %v857, %v954
          %v957 = vmul.f32 %v859, %v954
          %v958 = vadd.f32 %v950, %v955
          %v959 = vadd.f32 %v951, %v956
          %v960 = vadd.f32 %v952, %v957
          %s961 = sld [smem:[#allocation5 + $0x3d]]
          %v962 = vstv %s961
          %v963 = vmul.f32 %v861, %v962
          %v964 = vmul.f32 %v863, %v962
          %v965 = vmul.f32 %v865, %v962
          %v966 = vadd.f32 %v958, %v963
          %v967 = vadd.f32 %v959, %v964
          %v968 = vadd.f32 %v960, %v965
          %s969 = sld [smem:[#allocation5 + $0x3e]]
          %v970 = vstv %s969
          %v971 = vmul.f32 %v867, %v970
          %v972 = vmul.f32 %v869, %v970
          %v973 = vmul.f32 %v871, %v970
          %v974 = vadd.f32 %v966, %v971
          %v975 = vadd.f32 %v967, %v972
          %v976 = vadd.f32 %v968, %v973
          %vm980 = vcmask 1046528
          %v981 = vrot.slane %v974, 1
          %v982 = vrot.slane %v975, 1
          %v983 = vsel %vm980, %v981, %v982
          %v984 = vrot.slane %v976, 1
          %v985 = vsel %vm980, %v982, %v984
          %v988 = vadd.f32 %v831, %v983
          %v989 = vadd.f32 %v832, %v985
          %s990 = sld [smem:[#allocation5 + $0x3f]]
          %v991 = vstv %s990
          %v992 = vmul.f32 %v837, %v991
          %v993 = vmul.f32 %v839, %v991
          %v994 = vmul.f32 %v841, %v991
          %s995 = sld [smem:[#allocation5 + $0x40]]
          %v996 = vstv %s995
          %v997 = vmul.f32 %v843, %v996
          %v998 = vmul.f32 %v845, %v996
          %v999 = vmul.f32 %v847, %v996
          %v1000 = vadd.f32 %v992, %v997
          %v1001 = vadd.f32 %v993, %v998
          %v1002 = vadd.f32 %v994, %v999
          %s1003 = sld [smem:[#allocation5 + $0x41]]
          %v1004 = vstv %s1003
          %v1005 = vmul.f32 %v849, %v1004
          %v1006 = vmul.f32 %v851, %v1004
          %v1007 = vmul.f32 %v853, %v1004
          %v1008 = vadd.f32 %v1000, %v1005
          %v1009 = vadd.f32 %v1001, %v1006
          %v1010 = vadd.f32 %v1002, %v1007
          %s1011 = sld [smem:[#allocation5 + $0x42]]
          %v1012 = vstv %s1011
          %v1013 = vmul.f32 %v833, %v1012
          %v1014 = vmul.f32 %v834, %v1012
          %v1015 = vmul.f32 %v835, %v1012
          %v1016 = vadd.f32 %v1008, %v1013
          %v1017 = vadd.f32 %v1009, %v1014
          %v1018 = vadd.f32 %v1010, %v1015
          %s1019 = sld [smem:[#allocation5 + $0x43]]
          %v1020 = vstv %s1019
          %v1021 = vmul.f32 %v855, %v1020
          %v1022 = vmul.f32 %v857, %v1020
          %v1023 = vmul.f32 %v859, %v1020
          %v1024 = vadd.f32 %v1016, %v1021
          %v1025 = vadd.f32 %v1017, %v1022
          %v1026 = vadd.f32 %v1018, %v1023
          %s1027 = sld [smem:[#allocation5 + $0x44]]
          %v1028 = vstv %s1027
          %v1029 = vmul.f32 %v861, %v1028
          %v1030 = vmul.f32 %v863, %v1028
          %v1031 = vmul.f32 %v865, %v1028
          %v1032 = vadd.f32 %v1024, %v1029
          %v1033 = vadd.f32 %v1025, %v1030
          %v1034 = vadd.f32 %v1026, %v1031
          %s1035 = sld [smem:[#allocation5 + $0x45]]
          %v1036 = vstv %s1035
          %v1037 = vmul.f32 %v867, %v1036
          %v1038 = vmul.f32 %v869, %v1036
          %v1039 = vmul.f32 %v871, %v1036
          %v1040 = vadd.f32 %v1032, %v1037
          %v1041 = vadd.f32 %v1033, %v1038
          %v1042 = vadd.f32 %v1034, %v1039
          %v1046 = vrot.slane %v1040, 1
          %v1047 = vrot.slane %v1041, 1
          %v1048 = vsel %vm980, %v1046, %v1047
          %v1049 = vrot.slane %v1042, 1
          %v1050 = vsel %vm980, %v1047, %v1049
          %v1054 = vadd.f32 %v921, %v1048
          %v1055 = vadd.f32 %v922, %v1050
          %v1056 = vadd.f32 %v923, %v1049
          %s1057 = sld [smem:[#allocation5 + $0x46]]
          %v1058 = vstv %s1057
          %v1059 = vmul.f32 %v837, %v1058
          %v1060 = vmul.f32 %v839, %v1058
          %v1061 = vmul.f32 %v841, %v1058
          %s1062 = sld [smem:[#allocation5 + $0x47]]
          %v1063 = vstv %s1062
          %v1064 = vmul.f32 %v843, %v1063
          %v1065 = vmul.f32 %v845, %v1063
          %v1066 = vmul.f32 %v847, %v1063
          %v1067 = vadd.f32 %v1059, %v1064
          %v1068 = vadd.f32 %v1060, %v1065
          %v1069 = vadd.f32 %v1061, %v1066
          %s1070 = sld [smem:[#allocation5 + $0x48]]
          %v1071 = vstv %s1070
          %v1072 = vmul.f32 %v849, %v1071
          %v1073 = vmul.f32 %v851, %v1071
          %v1074 = vmul.f32 %v853, %v1071
          %v1075 = vadd.f32 %v1067, %v1072
          %v1076 = vadd.f32 %v1068, %v1073
          %v1077 = vadd.f32 %v1069, %v1074
          %s1078 = sld [smem:[#allocation5 + $0x49]]
          %v1079 = vstv %s1078
          %v1080 = vmul.f32 %v833, %v1079
          %v1081 = vmul.f32 %v834, %v1079
          %v1082 = vmul.f32 %v835, %v1079
          %v1083 = vadd.f32 %v1075, %v1080
          %v1084 = vadd.f32 %v1076, %v1081
          %v1085 = vadd.f32 %v1077, %v1082
          %s1086 = sld [smem:[#allocation5 + $0x4a]]
          %v1087 = vstv %s1086
          %v1088 = vmul.f32 %v855, %v1087
          %v1089 = vmul.f32 %v857, %v1087
          %v1090 = vmul.f32 %v859, %v1087
          %v1091 = vadd.f32 %v1083, %v1088
          %v1092 = vadd.f32 %v1084, %v1089
          %v1093 = vadd.f32 %v1085, %v1090
          %s1094 = sld [smem:[#allocation5 + $0x4b]]
          %v1095 = vstv %s1094
          %v1096 = vmul.f32 %v861, %v1095
          %v1097 = vmul.f32 %v863, %v1095
          %v1098 = vmul.f32 %v865, %v1095
          %v1099 = vadd.f32 %v1091, %v1096
          %v1100 = vadd.f32 %v1092, %v1097
          %v1101 = vadd.f32 %v1093, %v1098
          %s1102 = sld [smem:[#allocation5 + $0x4c]]
          %v1103 = vstv %s1102
          %v1104 = vmul.f32 %v867, %v1103
          %v1105 = vmul.f32 %v869, %v1103
          %v1106 = vmul.f32 %v871, %v1103
          %v1107 = vadd.f32 %v1099, %v1104
          %v1108 = vadd.f32 %v1100, %v1105
          %v1109 = vadd.f32 %v1101, %v1106
          %vm1113 = vcmask 1044480
          %v1114 = vrot.slane %v1107, 3
          %v1115 = vrot.slane %v1108, 3
          %v1116 = vsel %vm1113, %v1114, %v1115
          %v1117 = vrot.slane %v1109, 3
          %v1118 = vsel %vm1113, %v1115, %v1117
          %v1121 = vadd.f32 %v988, %v1116
          %v1122 = vadd.f32 %v989, %v1118
          %s1123 = sld [smem:[#allocation5 + $0x4d]]
          %v1124 = vstv %s1123
          %v1125 = vmul.f32 %v837, %v1124
          %v1126 = vmul.f32 %v839, %v1124
          %v1127 = vmul.f32 %v841, %v1124
          %s1128 = sld [smem:[#allocation5 + $0x4e]]
          %v1129 = vstv %s1128
          %v1130 = vmul.f32 %v843, %v1129
          %v1131 = vmul.f32 %v845, %v1129
          %v1132 = vmul.f32 %v847, %v1129
          %v1133 = vadd.f32 %v1125, %v1130
          %v1134 = vadd.f32 %v1126, %v1131
          %v1135 = vadd.f32 %v1127, %v1132
          %s1136 = sld [smem:[#allocation5 + $0x4f]]
          %v1137 = vstv %s1136
          %v1138 = vmul.f32 %v849, %v1137
          %v1139 = vmul.f32 %v851, %v1137
          %v1140 = vmul.f32 %v853, %v1137
          %v1141 = vadd.f32 %v1133, %v1138
          %v1142 = vadd.f32 %v1134, %v1139
          %v1143 = vadd.f32 %v1135, %v1140
          %s1144 = sld [smem:[#allocation5 + $0x50]]
          %v1145 = vstv %s1144
          %v1146 = vmul.f32 %v833, %v1145
          %v1147 = vmul.f32 %v834, %v1145
          %v1148 = vmul.f32 %v835, %v1145
          %v1149 = vadd.f32 %v1141, %v1146
          %v1150 = vadd.f32 %v1142, %v1147
          %v1151 = vadd.f32 %v1143, %v1148
          %s1152 = sld [smem:[#allocation5 + $0x51]]
          %v1153 = vstv %s1152
          %v1154 = vmul.f32 %v855, %v1153
          %v1155 = vmul.f32 %v857, %v1153
          %v1156 = vmul.f32 %v859, %v1153
          %v1157 = vadd.f32 %v1149, %v1154
          %v1158 = vadd.f32 %v1150, %v1155
          %v1159 = vadd.f32 %v1151, %v1156
          %s1160 = sld [smem:[#allocation5 + $0x52]]
          %v1161 = vstv %s1160
          %v1162 = vmul.f32 %v861, %v1161
          %v1163 = vmul.f32 %v863, %v1161
          %v1164 = vmul.f32 %v865, %v1161
          %v1165 = vadd.f32 %v1157, %v1162
          %v1166 = vadd.f32 %v1158, %v1163
          %v1167 = vadd.f32 %v1159, %v1164
          %s1168 = sld [smem:[#allocation5 + $0x53]]
          %v1169 = vstv %s1168
          %v1170 = vmul.f32 %v867, %v1169
          %v1171 = vmul.f32 %v869, %v1169
          %v1172 = vmul.f32 %v871, %v1169
          %v1173 = vadd.f32 %v1165, %v1170
          %v1174 = vadd.f32 %v1166, %v1171
          %v1175 = vadd.f32 %v1167, %v1172
          %v1179 = vrot.slane %v1173, 3
          %v1180 = vrot.slane %v1174, 3
          %v1181 = vsel %vm1113, %v1179, %v1180
          %v1182 = vrot.slane %v1175, 3
          %v1183 = vsel %vm1113, %v1180, %v1182
          %v1187 = vadd.f32 %v1054, %v1181
          %v1188 = vadd.f32 %v1055, %v1183
          %v1189 = vadd.f32 %v1056, %v1182
          %s1190 = sld [smem:[#allocation5 + $0x54]]
          %v1191 = vstv %s1190
          %v1192 = vmul.f32 %v837, %v1191
          %v1193 = vmul.f32 %v839, %v1191
          %v1194 = vmul.f32 %v841, %v1191
          %s1195 = sld [smem:[#allocation5 + $0x55]]
          %v1196 = vstv %s1195
          %v1197 = vmul.f32 %v843, %v1196
          %v1198 = vmul.f32 %v845, %v1196
          %v1199 = vmul.f32 %v847, %v1196
          %v1200 = vadd.f32 %v1192, %v1197
          %v1201 = vadd.f32 %v1193, %v1198
          %v1202 = vadd.f32 %v1194, %v1199
          %s1203 = sld [smem:[#allocation5 + $0x56]]
          %v1204 = vstv %s1203
          %v1205 = vmul.f32 %v849, %v1204
          %v1206 = vmul.f32 %v851, %v1204
          %v1207 = vmul.f32 %v853, %v1204
          %v1208 = vadd.f32 %v1200, %v1205
          %v1209 = vadd.f32 %v1201, %v1206
          %v1210 = vadd.f32 %v1202, %v1207
          %s1211 = sld [smem:[#allocation5 + $0x57]]
          %v1212 = vstv %s1211
          %v1213 = vmul.f32 %v833, %v1212
          %v1214 = vmul.f32 %v834, %v1212
          %v1215 = vmul.f32 %v835, %v1212
          %v1216 = vadd.f32 %v1208, %v1213
          %v1217 = vadd.f32 %v1209, %v1214
          %v1218 = vadd.f32 %v1210, %v1215
          %s1219 = sld [smem:[#allocation5 + $0x58]]
          %v1220 = vstv %s1219
          %v1221 = vmul.f32 %v855, %v1220
          %v1222 = vmul.f32 %v857, %v1220
          %v1223 = vmul.f32 %v859, %v1220
          %v1224 = vadd.f32 %v1216, %v1221
          %v1225 = vadd.f32 %v1217, %v1222
          %v1226 = vadd.f32 %v1218, %v1223
          %s1227 = sld [smem:[#allocation5 + $0x59]]
          %v1228 = vstv %s1227
          %v1229 = vmul.f32 %v861, %v1228
          %v1230 = vmul.f32 %v863, %v1228
          %v1231 = vmul.f32 %v865, %v1228
          %v1232 = vadd.f32 %v1224, %v1229
          %v1233 = vadd.f32 %v1225, %v1230
          %v1234 = vadd.f32 %v1226, %v1231
          %s1235 = sld [smem:[#allocation5 + $0x5a]]
          %v1236 = vstv %s1235
          %v1237 = vmul.f32 %v867, %v1236
          %v1238 = vmul.f32 %v869, %v1236
          %v1239 = vmul.f32 %v871, %v1236
          %v1240 = vadd.f32 %v1232, %v1237
          %v1241 = vadd.f32 %v1233, %v1238
          %v1242 = vadd.f32 %v1234, %v1239
          %vm1246 = vcmask 1042432
          %v1247 = vrot.slane %v1240, 5
          %v1248 = vrot.slane %v1241, 5
          %v1249 = vsel %vm1246, %v1247, %v1248
          %v1250 = vrot.slane %v1242, 5
          %v1251 = vsel %vm1246, %v1248, %v1250
          %v1254 = vadd.f32 %v1121, %v1249
          %v1255 = vadd.f32 %v1122, %v1251
          %s1256 = sld [smem:[#allocation5 + $0x5b]]
          %v1257 = vstv %s1256
          %v1258 = vmul.f32 %v837, %v1257
          %v1259 = vmul.f32 %v839, %v1257
          %v1260 = vmul.f32 %v841, %v1257
          %s1261 = sld [smem:[#allocation5 + $0x5c]]
          %v1262 = vstv %s1261
          %v1263 = vmul.f32 %v843, %v1262
          %v1264 = vmul.f32 %v845, %v1262
          %v1265 = vmul.f32 %v847, %v1262
          %v1266 = vadd.f32 %v1258, %v1263
          %v1267 = vadd.f32 %v1259, %v1264
          %v1268 = vadd.f32 %v1260, %v1265
          %s1269 = sld [smem:[#allocation5 + $0x5d]]
          %v1270 = vstv %s1269
          %v1271 = vmul.f32 %v849, %v1270
          %v1272 = vmul.f32 %v851, %v1270
          %v1273 = vmul.f32 %v853, %v1270
          %v1274 = vadd.f32 %v1266, %v1271
          %v1275 = vadd.f32 %v1267, %v1272
          %v1276 = vadd.f32 %v1268, %v1273
          %s1277 = sld [smem:[#allocation5 + $0x5e]]
          %v1278 = vstv %s1277
          %v1279 = vmul.f32 %v833, %v1278
          %v1280 = vmul.f32 %v834, %v1278
          %v1281 = vmul.f32 %v835, %v1278
          %v1282 = vadd.f32 %v1274, %v1279
          %v1283 = vadd.f32 %v1275, %v1280
          %v1284 = vadd.f32 %v1276, %v1281
          %s1285 = sld [smem:[#allocation5 + $0x5f]]
          %v1286 = vstv %s1285
          %v1287 = vmul.f32 %v855, %v1286
          %v1288 = vmul.f32 %v857, %v1286
          %v1289 = vmul.f32 %v859, %v1286
          %v1290 = vadd.f32 %v1282, %v1287
          %v1291 = vadd.f32 %v1283, %v1288
          %v1292 = vadd.f32 %v1284, %v1289
          %s1293 = sld [smem:[#allocation5 + $0x60]]
          %v1294 = vstv %s1293
          %v1295 = vmul.f32 %v861, %v1294
          %v1296 = vmul.f32 %v863, %v1294
          %v1297 = vmul.f32 %v865, %v1294
          %v1298 = vadd.f32 %v1290, %v1295
          %v1299 = vadd.f32 %v1291, %v1296
          %v1300 = vadd.f32 %v1292, %v1297
          %s1301 = sld [smem:[#allocation5 + $0x61]]
          %v1302 = vstv %s1301
          %v1303 = vmul.f32 %v867, %v1302
          %v1304 = vmul.f32 %v869, %v1302
          %v1305 = vmul.f32 %v871, %v1302
          %v1306 = vadd.f32 %v1298, %v1303
          %v1307 = vadd.f32 %v1299, %v1304
          %v1308 = vadd.f32 %v1300, %v1305
          %v1312 = vrot.slane %v1306, 5
          %v1313 = vrot.slane %v1307, 5
          %v1314 = vsel %vm1246, %v1312, %v1313
          %v1315 = vrot.slane %v1308, 5
          %v1316 = vsel %vm1246, %v1313, %v1315
          %v1320 = vadd.f32 %v1187, %v1314
          %v1321 = vadd.f32 %v1188, %v1316
          %v1322 = vadd.f32 %v1189, %v1315
          %v1326 = vrot.slane %v1320, 1
          %v1327 = vrot.slane %v1321, 1
          %v1328 = vsel %vm980, %v1326, %v1327
          %v1329 = vrot.slane %v1322, 1
          %v1330 = vsel %vm980, %v1327, %v1329
          %v1333 = vadd.f32 %v1254, %v1328
          %v1334 = vadd.f32 %v1255, %v1330
          %v1335 = vxor.u32 %v1333, 2147483648
          %v1336 = vxor.u32 %v1334, 2147483648
          %v1337 = vmul.f32 %v1335, 1.442695
          %v1338 = vpow.pop %v1337
          %v1339 = vmul.f32 %v1336, 1.442695
          %v1340 = vpow.pop %v1339
          %v1341 = vadd.f32 %v1338, 1.0
          %v1342 = vadd.f32 %v1340, 1.0
          %v1343 = vrcp.pop %v1341
          %v1344 = vmul.f32 1.0, %v1343
          %v1345 = vrcp.pop %v1342
          %v1346 = vmul.f32 1.0, %v1345
          %vm1347 = vcmask 130048
          %1348 = vst.msk [vmem:[%s172] sm:$0xff] %vm1347, %v1344
          %1349 = vst.msk [vmem:[%s172 + $0x8] sm:$0xff] %vm1347, %v1346
        $region40: #{spatial_attention.1} parent=27 // pred_fallthru
          _
        %s1350 = sand.u32 %s86, 1
        %s1351 = scalar_lea.sflag [#allocation6], %s1350
        %s1352 = sand.u32 %s86, 1
        %s1353 = smul.addr %s1352, 16
        %s1354 = scalar_lea.vmem [#allocation8], %s1353
        // Predicated region
        $region41: #{spatial_attention.1} parent=27 // pred_check
          %p1355 = pneg %p96
        $region42: #{spatial_attention.1} parent=27 // pred_check_branch
          %1357 = sbr.rel (%p1355) target = $region44
        $region43: #{spatial_attention.1} parent=27 // pred_region
          %s1359 = ssub.s32 256, 256
          %1360 = vsyncadd %s1351, %s1359
          %s1361 = smul.addr %s21, 2
          %s1362 = smul.addr %s1361, 128
          %s1363 = scalar_lea.hbm %s2, %s1362
          %s1364 = sshll.u32 %s1354, 4
          %s1365 = int_to_ptr.vmem [resolvable:$true] %s1364
          %1370 = dma.vmem_to_hbm [thread:$0]  %s1365, 256, %s1363, %s1351, 128, 128, 8
        $region44: #{spatial_attention.1} parent=27 // pred_fallthru
          _
      $region28: #{spatial_attention.1} parent=5 // pred_fallthru
        _
      %p1371 = scmp.le.s32.totalorder 2, %s12
      // Predicated region
      $region45: #{spatial_attention.1} parent=5 // pred_check
        %p1372 = pneg %p1371
      $region46: #{spatial_attention.1} parent=5 // pred_check_branch
        %1374 = sbr.rel (%p1372) target = $region48
      $region47: #{spatial_attention.1} parent=5 // pred_region
        %s1375 = ssub.s32 %s12, 2
        // Predicated region
        $region49: #{spatial_attention.1} parent=47 // pred_check
          %p1376 = pneg %p102
        $region50: #{spatial_attention.1} parent=47 // pred_check_branch
          %1378 = sbr.rel (%p1376) target = $region52
        $region51: #{spatial_attention.1} parent=47 // pred_region
          %s1379 = sand.u32 %s87, 1
          %s1380 = scalar_lea.sflag [#allocation6], %s1379
          %s1381 = sand.u32 %s87, 1
          %s1382 = smul.addr %s1381, 16
          %s1383 = scalar_lea.vmem [#allocation8], %s1382
          %1384 = dma.done %s1380, 256
        $region52: #{spatial_attention.1} parent=47 // pred_fallthru
          _
      $region48: #{spatial_attention.1} parent=5 // pred_fallthru
        _
    $region6: #{spatial_attention.1} parent=1 // loop_footer
      %s16 = sadd.s32 1, %s12
    $region7: #{spatial_attention.1} parent=1 // loop_footer_branch
      %11 = sbr.rel target = $region3
    $region8: #{spatial_attention.1} parent=1 // loop_exit
      _
    %1385 = vsyncpa [#allocation6], 1
    %s1386 = scalar_lea.sflag [#allocation6], 1
    %1387 = vsyncpa %s1386, 1
    %1388 = vsyncpa [#allocation7], 1
    %s1389 = scalar_lea.sflag [#allocation7], 1
    %1390 = vsyncpa %s1389, 1

</llo_original>
